<compile_context>
chip_gen: v7x
topology: tpu7x:2x2x1
jax: 0.10.0
libtpu: 0.0.40
codegen_flags: <defaults>
</compile_context>

<pallas_src>
import functools

import jax
import jax.numpy as jnp
from jax import lax
from jax.experimental import pallas as pl
from jax.experimental.pallas import tpu as pltpu

EPS = 1e-5
MATMUL_DTYPE = jnp.float32   # set to jnp.bfloat16 for large-channel workloads (re-validate tol)


# ----------------------------------------------------------------------------- kernels


def _conv_stage_kernel(x_ref, scale_ref, shift_ref, w_ref, conv_ref, stats_ref, xp_ref,
                       *, H, W, Cin, Cout, apply_act):
    """Fused (prev-stage BN+ReLU) -> row zero-pad -> Conv3x3 -> per-block partial BN stats.

    Grid: (N // B_blk,), marked "parallel" (no resident accumulator -> v7x megacore OK).

    x_ref     : (B, H, W*Cin)       lane-dense stage input: previous stage's *raw* conv output
                                    (apply_act=True) or the network input (apply_act=False)
    scale_ref : (1, W*Cin)          prev-stage BN scale, pre-expanded to lane layout (wrapper)
    shift_ref : (1, W*Cin)          prev-stage BN shift, pre-expanded
    w_ref     : (3, W*Cin, W*Cout)  banded-Toeplitz conv weights, one slab per row tap dy
    conv_ref  : (B, H, W*Cout)      raw (pre-BN) conv output, lane-dense
    stats_ref : (1, 2, W*Cout)      per-block partial [sum ; sum_sq], lane-dense
    xp_ref    : (B, H+2, W*Cin)     VMEM scratch: row-padded activation
    """
    B = conv_ref.shape[0]
    x = x_ref[...]
    if apply_act:
        # Previous stage's BN + ReLU, fused here (saves a padded-activation HBM round trip).
        y = jnp.maximum(x * scale_ref[0] + shift_ref[0], 0.0)
    else:
        y = x

    # Row-padded activation in scratch: zero only the two border rows, interior as one
    # lane-dense slab store (no jnp.concatenate padding, nothing padded ever hits HBM).
    zrow = jnp.zeros((B, 1, W * Cin), jnp.float32)
    xp_ref[:, 0:1, :] = zrow
    xp_ref[:, H + 1:H + 2, :] = zrow
    xp_ref[:, 1:H + 1, :] = y

    # Conv3x3 as three MXU matmuls (one per row tap).  Column taps + horizontal zero padding
    # live in the Toeplitz RHS, so the LHS is a plain sublane-sliced read of the scratch and
    # the accumulator is already in the lane-dense (B*H, W*Cout) output layout.
    acc = jnp.zeros((B * H, W * Cout), jnp.float32)
    for dy in range(3):
        lhs = xp_ref[:, dy:dy + H, :].reshape(B * H, W * Cin)
        acc = acc + jnp.dot(lhs.astype(MATMUL_DTYPE),
                            w_ref[dy].astype(MATMUL_DTYPE),
                            preferred_element_type=jnp.float32)

    conv_ref[...] = acc.reshape(B, H, W * Cout)

    # Per-block partial BN statistics, kept lane-dense; the (tiny) lane->channel fold and the
    # cross-block reduction happen in the JAX finalize.
    s1 = jnp.sum(acc, axis=0, keepdims=True)           # (1, W*Cout)
    s2 = jnp.sum(acc * acc, axis=0, keepdims=True)      # (1, W*Cout)
    stats_ref[0] = jnp.concatenate([s1, s2], axis=0)    # (2, W*Cout)


def _bn_relu_kernel(c_ref, scale_ref, shift_ref, o_ref):
    """Final stage only: normalize + ReLU on the lane-dense raw conv output."""
    o_ref[...] = jnp.maximum(c_ref[...] * scale_ref[0] + shift_ref[0], 0.0)


# ----------------------------------------------------------------------------- wrappers


def _toeplitz_weights(w_oihw, W):
    """PyTorch (Cout, Cin, 3, 3) weights -> (3, W*Cin, W*Cout) banded-Toeplitz slabs.

    toe[dy, iw*Cin + ci, ow*Cout + co] = w[co, ci, dy, iw - ow + 1]  (0 outside the band),
    folding the three column taps and the horizontal zero padding into the matmul RHS.
    """
    w_t = jnp.transpose(w_oihw, (2, 3, 1, 0)).astype(jnp.float32)   # (dy, dx, ci, co)
    Cin, Cout = w_t.shape[2], w_t.shape[3]
    iw = jnp.arange(W)[:, None]
    ow = jnp.arange(W)[None, :]
    dx = iw - ow + 1                                                 # (W, W)
    valid = (dx >= 0) & (dx < 3)
    toe = w_t[:, jnp.clip(dx, 0, 2)]                                 # (3, W, W, Cin, Cout)
    toe = jnp.where(valid[None, :, :, None, None], toe, 0.0)
    return jnp.transpose(toe, (0, 1, 3, 2, 4)).reshape(3, W * Cin, W * Cout)


def _vmem_limit_bytes():
    # Size against the real chip: 64 MiB physical VMEM on v7x vs 128 MiB on v5e/v6e; leave
    # headroom for Mosaic's internal scratch.  Conservative v7x fallback if query fails.
    try:
        phys = int(pltpu.get_tpu_info().vmem_capacity_bytes)
    except Exception:
        phys = 64 << 20
    return int(min(phys - (16 << 20), 110 << 20))


def _pick_batch_block(N, H, W, Cin, Cout, budget_bytes):
    """Largest divisor of N whose double-buffered per-step working set fits the budget."""
    per_img = 4 * (H * W * Cin + H * W * Cout + (H + 2) * W * Cin)          # in + out + scratch
    fixed = 4 * (3 * W * Cin * W * Cout + 2 * W * Cout + 2 * W * Cin)       # weights + stats + rows
    b = max(1, min(N, (budget_bytes - 2 * fixed) // max(2 * per_img, 1)))   # 2x double-buffering
    while N % b:
        b -= 1
    return b


def _conv_stage(x_act, scale_vec, shift_vec, w_toe, *, Cin, Cout, apply_act, vmem_limit):
    """One fused stage: [BN+ReLU of prev stage] -> conv3x3 -> (raw conv out, partial stats)."""
    N, H, WCin = x_act.shape
    W = WCin // Cin
    B_blk = _pick_batch_block(N, H, W, Cin, Cout, vmem_limit // 3)
    n_blocks = N // B_blk

    # Pre-expand BN scale/shift to the (1, W*Cin) lane layout once, outside the kernel.
    scale_row = jnp.tile(scale_vec.astype(jnp.float32), (W,)).reshape(1, W * Cin)
    shift_row = jnp.tile(shift_vec.astype(jnp.float32), (W,)).reshape(1, W * Cin)

    kernel = functools.partial(_conv_stage_kernel, H=H, W=W, Cin=Cin, Cout=Cout,
                               apply_act=apply_act)
    conv_raw, stats = pl.pallas_call(
        kernel,
        grid=(n_blocks,),
        in_specs=[
            pl.BlockSpec((B_blk, H, W * Cin), lambda b: (b, 0, 0)),
            pl.BlockSpec((1, W * Cin), lambda b: (0, 0)),
            pl.BlockSpec((1, W * Cin), lambda b: (0, 0)),
            pl.BlockSpec((3, W * Cin, W * Cout), lambda b: (0, 0, 0)),
        ],
        out_specs=[
            pl.BlockSpec((B_blk, H, W * Cout), lambda b: (b, 0, 0)),
            pl.BlockSpec((1, 2, W * Cout), lambda b: (b, 0, 0)),
        ],
        out_shape=[
            jax.ShapeDtypeStruct((N, H, W * Cout), jnp.float32),
            jax.ShapeDtypeStruct((n_blocks, 2, W * Cout), jnp.float32),
        ],
        scratch_shapes=[pltpu.VMEM((B_blk, H + 2, W * Cin), jnp.float32)],
        compiler_params=pltpu.CompilerParams(
            dimension_semantics=("parallel",),       # per-block partial stats -> megacore-safe
            vmem_limit_bytes=vmem_limit),
    )(x_act, scale_row, shift_row, w_toe)
    return conv_raw, stats


def _finalize_bn(stats, gamma, beta, count, W, Cout):
    """Tiny JAX finalize: fold per-block lane-dense partials to per-channel scale/shift."""
    s = jnp.sum(stats, axis=0)                     # (2, W*Cout): reduce per-block partials
    s = s.reshape(2, W, Cout).sum(axis=1)          # (2, Cout):   fold lane layout to channels
    mean = s[0] / count
    # TODO(synk): single-pass E[x^2]-E[x]^2 (clamped); use Welford/two-pass if |mean| >> std.
    var = jnp.maximum(s[1] / count - mean * mean, 0.0)
    scale = gamma * lax.rsqrt(var + EPS)
    shift = beta - mean * scale
    return scale, shift


def _bn_relu_pass(conv_raw, scale_vec, shift_vec, *, W, Cout, vmem_limit):
    """Standalone BN+ReLU for the final stage only (earlier stages are fused into the conv)."""
    N, H, _ = conv_raw.shape
    B_blk = _pick_batch_block(N, H, W, Cout, Cout, vmem_limit // 3)
    n_blocks = N // B_blk
    scale_row = jnp.tile(scale_vec.astype(jnp.float32), (W,)).reshape(1, W * Cout)
    shift_row = jnp.tile(shift_vec.astype(jnp.float32), (W,)).reshape(1, W * Cout)
    return pl.pallas_call(
        _bn_relu_kernel,
        grid=(n_blocks,),
        in_specs=[
            pl.BlockSpec((B_blk, H, W * Cout), lambda b: (b, 0, 0)),
            pl.BlockSpec((1, W * Cout), lambda b: (0, 0)),
            pl.BlockSpec((1, W * Cout), lambda b: (0, 0)),
        ],
        out_specs=pl.BlockSpec((B_blk, H, W * Cout), lambda b: (b, 0, 0)),
        out_shape=jax.ShapeDtypeStruct((N, H, W * Cout), jnp.float32),
        compiler_params=pltpu.CompilerParams(
            dimension_semantics=("parallel",),
            vmem_limit_bytes=vmem_limit),
    )(conv_raw, scale_row, shift_row)


def conv_block_forward(x_nchw, params):
    """ConvBlock.forward — count x (Conv3x3 pad=1 no-bias -> BN(batch stats) -> ReLU).

    NCHW in, NCHW out.  Inter-stage data stays lane-dense (N, H, W*C); each stage's BN+ReLU
    is applied inside the next stage's conv kernel.
    """
    N, C0, H, W = x_nchw.shape
    vmem_limit = _vmem_limit_bytes()
    count = jnp.float32(N * H * W)

    # NCHW -> lane-dense (N, H, W*C); lane index = w*C + c everywhere below.
    act = jnp.transpose(x_nchw, (0, 2, 3, 1)).reshape(N, H, W * C0).astype(jnp.float32)

    cin = C0
    apply_act = False
    scale_vec = jnp.ones((cin,), jnp.float32)        # unused while apply_act=False
    shift_vec = jnp.zeros((cin,), jnp.float32)
    conv_raw = act
    for (w, gamma, beta) in params:
        cout = w.shape[0]
        w_toe = _toeplitz_weights(w, W).astype(MATMUL_DTYPE)   # weights cast once, in wrapper
        conv_raw, stats = _conv_stage(conv_raw, scale_vec, shift_vec, w_toe,
                                      Cin=cin, Cout=cout, apply_act=apply_act,
                                      vmem_limit=vmem_limit)
        scale_vec, shift_vec = _finalize_bn(stats, gamma, beta, count, W, cout)
        cin = cout
        apply_act = True

    out_ld = _bn_relu_pass(conv_raw, scale_vec, shift_vec, W=W, Cout=cin,
                           vmem_limit=vmem_limit)
    out = out_ld.reshape(N, H, W, cin)
    return jnp.transpose(out, (0, 3, 1, 2))


# ----------------------------------------------------------------------------- test harness


def init_conv_block_params(key, in_channels, out_channels, count=2):
    params = []
    for i in range(count):
        cin = in_channels if i == 0 else out_channels
        key, sub = jax.random.split(key)
        fan_in = cin * 3 * 3
        bound = 1.0 / jnp.sqrt(jnp.float32(fan_in))
        w = jax.random.uniform(sub, (out_channels, cin, 3, 3),
                               minval=-bound, maxval=bound, dtype=jnp.float32)
        gamma = jnp.ones((out_channels,), jnp.float32)    # BatchNorm2d default init
        beta = jnp.zeros((out_channels,), jnp.float32)
        params.append((w, gamma, beta))
    return params


def _reference_forward(x_nchw, params):
    """Pure-JAX reference (lax conv + BN(batch stats) + ReLU) for validation."""
    x = jnp.transpose(x_nchw, (0, 2, 3, 1))
    for (w, g, b) in params:
        w_hwio = jnp.transpose(w, (2, 3, 1, 0))
        y = jax.lax.conv_general_dilated(
            x, w_hwio, window_strides=(1, 1), padding="SAME",
            dimension_numbers=("NHWC", "HWIO", "NHWC"))
        mean = jnp.mean(y, axis=(0, 1, 2))
        var = jnp.mean((y - mean) ** 2, axis=(0, 1, 2))
        y = (y - mean) * jax.lax.rsqrt(var + EPS) * g + b
        x = jnp.maximum(y, 0.0)
    return jnp.transpose(x, (0, 3, 1, 2))


if __name__ == "__main__":
    key = jax.random.PRNGKey(0)
    k_x, k_p = jax.random.split(key)

    N, Cin, Cout, H, W = 2, 4, 8, 16, 16
    x = jax.random.normal(k_x, (N, Cin, H, W), dtype=jnp.float32)    # NCHW like PyTorch
    params = init_conv_block_params(k_p, Cin, Cout, count=2)

    fwd = jax.jit(conv_block_forward)
    out = jax.block_until_ready(fwd(x, params))
    ref = jax.block_until_ready(_reference_forward(x, params))

    assert out.shape == (N, Cout, H, W), out.shape
    err = float(jnp.max(jnp.abs(out - ref)))
    tol = 1e-3 if MATMUL_DTYPE == jnp.float32 else 5e-2
    assert jnp.allclose(out, ref, atol=tol, rtol=tol), err

    print("KERNEL_OK")
</pallas_src>

<mosaic_0001>
module attributes {stable_mosaic.version = 11 : i64} {
  func.func @_conv_stage_kernel(%arg0: i32, %arg1: memref<2x16x64xf32, #tpu.memory_space<vmem>>, %arg2: memref<1x64xf32, #tpu.memory_space<vmem>>, %arg3: memref<1x64xf32, #tpu.memory_space<vmem>>, %arg4: memref<3x64x128xf32, #tpu.memory_space<vmem>>, %arg5: memref<2x16x128xf32, #tpu.memory_space<vmem>>, %arg6: memref<1x2x128xf32, #tpu.memory_space<vmem>>, %arg7: memref<2x18x64xf32, #tpu.memory_space<vmem>>) attributes {dimension_semantics = [#tpu.dimension_semantics<parallel>], iteration_bounds = array<i64: 1>, scalar_prefetch = 0 : i64, scratch_operands = 1 : i64, tpu.core_type = #tpu.core_type<tc>, window_params = [{transform_indices = @transform_0, window_bounds = array<i64: 2, 16, 64>}, {pipeline_mode = #tpu.pipeline_mode<synchronous>, transform_indices = @transform_1, window_bounds = array<i64: 1, 64>}, {pipeline_mode = #tpu.pipeline_mode<synchronous>, transform_indices = @transform_2, window_bounds = array<i64: 1, 64>}, {pipeline_mode = #tpu.pipeline_mode<synchronous>, transform_indices = @transform_3, window_bounds = array<i64: 3, 64, 128>}, {transform_indices = @transform_4, window_bounds = array<i64: 2, 16, 128>}, {transform_indices = @transform_5, window_bounds = array<i64: 1, 2, 128>}]} {
    %c0 = arith.constant 0 : index
    %c0_0 = arith.constant 0 : index
    %c0_1 = arith.constant 0 : index
    %0 = vector.load %arg1[%c0, %c0_0, %c0_1] : memref<2x16x64xf32, #tpu.memory_space<vmem>>, vector<2x16x64xf32>
    %cst = arith.constant 0.000000e+00 : f32
    %1 = vector.broadcast %cst : f32 to vector<2x1x64xf32>
    %c0_2 = arith.constant 0 : index
    %c0_3 = arith.constant 0 : index
    %c0_4 = arith.constant 0 : index
    %2 = vector.load %arg7[%c0_2, %c0_3, %c0_4] : memref<2x18x64xf32, #tpu.memory_space<vmem>>, vector<2x1x64xf32>
    tpu.vector_store %arg7[%c0_2, %c0_3, %c0_4], %1 {strides = array<i32>} : memref<2x18x64xf32, #tpu.memory_space<vmem>>, vector<2x1x64xf32>,
    %c0_5 = arith.constant 0 : index
    %c17 = arith.constant 17 : index
    %c0_6 = arith.constant 0 : index
    %3 = vector.load %arg7[%c0_5, %c17, %c0_6] : memref<2x18x64xf32, #tpu.memory_space<vmem>>, vector<2x1x64xf32>
    tpu.vector_store %arg7[%c0_5, %c17, %c0_6], %1 {strides = array<i32>} : memref<2x18x64xf32, #tpu.memory_space<vmem>>, vector<2x1x64xf32>,
    %c0_7 = arith.constant 0 : index
    %c1 = arith.constant 1 : index
    %c0_8 = arith.constant 0 : index
    %4 = vector.load %arg7[%c0_7, %c1, %c0_8] : memref<2x18x64xf32, #tpu.memory_space<vmem>>, vector<2x16x64xf32>
    tpu.vector_store %arg7[%c0_7, %c1, %c0_8], %0 {strides = array<i32>} : memref<2x18x64xf32, #tpu.memory_space<vmem>>, vector<2x16x64xf32>,
    %cst_9 = arith.constant 0.000000e+00 : f32
    %5 = vector.broadcast %cst_9 : f32 to vector<32x128xf32>
    %c0_10 = arith.constant 0 : index
    %c0_11 = arith.constant 0 : index
    %c0_12 = arith.constant 0 : index
    %6 = vector.load %arg7[%c0_10, %c0_11, %c0_12] : memref<2x18x64xf32, #tpu.memory_space<vmem>>, vector<2x16x64xf32>
    %7 = vector.shape_cast %6 : vector<2x16x64xf32> to vector<32x64xf32>
    %c0_13 = arith.constant 0 : index
    %c0_14 = arith.constant 0 : index
    %c0_15 = arith.constant 0 : index
    %8 = vector.load %arg4[%c0_13, %c0_14, %c0_15] : memref<3x64x128xf32, #tpu.memory_space<vmem>>, vector<1x64x128xf32>
    %9 = vector.shape_cast %8 : vector<1x64x128xf32> to vector<64x128xf32>
    %cst_16 = arith.constant dense<0.000000e+00> : vector<32x128xf32>
    %10 = tpu.matmul %7, %9, %cst_16 {dimension_numbers = #tpu.dot_dimension_numbers<[1], [0], [0], [1], [0, 0, 1, 1], [], []>} : vector<32x64xf32>, vector<64x128xf32>, vector<32x128xf32> -> vector<32x128xf32>
    %11 = arith.addf %5, %10 : vector<32x128xf32>
    %c0_17 = arith.constant 0 : index
    %c1_18 = arith.constant 1 : index
    %c0_19 = arith.constant 0 : index
    %12 = vector.load %arg7[%c0_17, %c1_18, %c0_19] : memref<2x18x64xf32, #tpu.memory_space<vmem>>, vector<2x16x64xf32>
    %13 = vector.shape_cast %12 : vector<2x16x64xf32> to vector<32x64xf32>
    %c1_20 = arith.constant 1 : index
    %c0_21 = arith.constant 0 : index
    %c0_22 = arith.constant 0 : index
    %14 = vector.load %arg4[%c1_20, %c0_21, %c0_22] : memref<3x64x128xf32, #tpu.memory_space<vmem>>, vector<1x64x128xf32>
    %15 = vector.shape_cast %14 : vector<1x64x128xf32> to vector<64x128xf32>
    %cst_23 = arith.constant dense<0.000000e+00> : vector<32x128xf32>
    %16 = tpu.matmul %13, %15, %cst_23 {dimension_numbers = #tpu.dot_dimension_numbers<[1], [0], [0], [1], [0, 0, 1, 1], [], []>} : vector<32x64xf32>, vector<64x128xf32>, vector<32x128xf32> -> vector<32x128xf32>
    %17 = arith.addf %11, %16 : vector<32x128xf32>
    %c0_24 = arith.constant 0 : index
    %c2 = arith.constant 2 : index
    %c0_25 = arith.constant 0 : index
    %18 = vector.load %arg7[%c0_24, %c2, %c0_25] : memref<2x18x64xf32, #tpu.memory_space<vmem>>, vector<2x16x64xf32>
    %19 = vector.shape_cast %18 : vector<2x16x64xf32> to vector<32x64xf32>
    %c2_26 = arith.constant 2 : index
    %c0_27 = arith.constant 0 : index
    %c0_28 = arith.constant 0 : index
    %20 = vector.load %arg4[%c2_26, %c0_27, %c0_28] : memref<3x64x128xf32, #tpu.memory_space<vmem>>, vector<1x64x128xf32>
    %21 = vector.shape_cast %20 : vector<1x64x128xf32> to vector<64x128xf32>
    %cst_29 = arith.constant dense<0.000000e+00> : vector<32x128xf32>
    %22 = tpu.matmul %19, %21, %cst_29 {dimension_numbers = #tpu.dot_dimension_numbers<[1], [0], [0], [1], [0, 0, 1, 1], [], []>} : vector<32x64xf32>, vector<64x128xf32>, vector<32x128xf32> -> vector<32x128xf32>
    %23 = arith.addf %17, %22 : vector<32x128xf32>
    %24 = vector.shape_cast %23 : vector<32x128xf32> to vector<2x16x128xf32>
    %c0_30 = arith.constant 0 : index
    %c0_31 = arith.constant 0 : index
    %c0_32 = arith.constant 0 : index
    %25 = vector.load %arg5[%c0_30, %c0_31, %c0_32] : memref<2x16x128xf32, #tpu.memory_space<vmem>>, vector<2x16x128xf32>
    tpu.vector_store %arg5[%c0_30, %c0_31, %c0_32], %24 {strides = array<i32>} : memref<2x16x128xf32, #tpu.memory_space<vmem>>, vector<2x16x128xf32>,
    %cst_33 = arith.constant dense<0.000000e+00> : vector<128xf32>
    %26 = vector.multi_reduction <add>, %23, %cst_33 [0] : vector<32x128xf32> to vector<128xf32>
    %27 = vector.shape_cast %26 : vector<128xf32> to vector<1x128xf32>
    %28 = arith.mulf %23, %23 : vector<32x128xf32>
    %cst_34 = arith.constant dense<0.000000e+00> : vector<128xf32>
    %29 = vector.multi_reduction <add>, %28, %cst_34 [0] : vector<32x128xf32> to vector<128xf32>
    %30 = vector.shape_cast %29 : vector<128xf32> to vector<1x128xf32>
    %31 = tpu.concatenate %27, %30 in 0 : vector<1x128xf32>, vector<1x128xf32> -> vector<2x128xf32>
    %c0_35 = arith.constant 0 : index
    %c0_36 = arith.constant 0 : index
    %c0_37 = arith.constant 0 : index
    %32 = vector.load %arg6[%c0_35, %c0_36, %c0_37] : memref<1x2x128xf32, #tpu.memory_space<vmem>>, vector<1x2x128xf32>
    %33 = vector.shape_cast %32 : vector<1x2x128xf32> to vector<2x128xf32>
    %34 = vector.shape_cast %31 : vector<2x128xf32> to vector<1x2x128xf32>
    tpu.vector_store %arg6[%c0_35, %c0_36, %c0_37], %34 {strides = array<i32>} : memref<1x2x128xf32, #tpu.memory_space<vmem>>, vector<1x2x128xf32>,
    return
  }
  func.func @transform_0(%arg0: i32) -> (i32, i32, i32) {
    %c0_i32 = arith.constant 0 : i32
    %c0_i32_0 = arith.constant 0 : i32
    %c0_i32_1 = arith.constant 0 : i32
    return %arg0, %c0_i32, %c0_i32_0 : i32, i32, i32
  }
  func.func @transform_1(%arg0: i32) -> (i32, i32) {
    %c0_i32 = arith.constant 0 : i32
    %c0_i32_0 = arith.constant 0 : i32
    %c0_i32_1 = arith.constant 0 : i32
    return %c0_i32, %c0_i32_0 : i32, i32
  }
  func.func @transform_2(%arg0: i32) -> (i32, i32) {
    %c0_i32 = arith.constant 0 : i32
    %c0_i32_0 = arith.constant 0 : i32
    %c0_i32_1 = arith.constant 0 : i32
    return %c0_i32, %c0_i32_0 : i32, i32
  }
  func.func @transform_3(%arg0: i32) -> (i32, i32, i32) {
    %c0_i32 = arith.constant 0 : i32
    %c0_i32_0 = arith.constant 0 : i32
    %c0_i32_1 = arith.constant 0 : i32
    %c0_i32_2 = arith.constant 0 : i32
    return %c0_i32, %c0_i32_0, %c0_i32_1 : i32, i32, i32
  }
  func.func @transform_4(%arg0: i32) -> (i32, i32, i32) {
    %c0_i32 = arith.constant 0 : i32
    %c0_i32_0 = arith.constant 0 : i32
    %c0_i32_1 = arith.constant 0 : i32
    return %arg0, %c0_i32, %c0_i32_0 : i32, i32, i32
  }
  func.func @transform_5(%arg0: i32) -> (i32, i32, i32) {
    %c0_i32 = arith.constant 0 : i32
    %c0_i32_0 = arith.constant 0 : i32
    %c0_i32_1 = arith.constant 0 : i32
    return %arg0, %c0_i32, %c0_i32_0 : i32, i32, i32
  }
}

module attributes {stable_mosaic.version = 11 : i64} {
  func.func @_conv_stage_kernel(%arg0: i32, %arg1: memref<2x16x128xf32, #tpu.memory_space<vmem>>, %arg2: memref<1x128xf32, #tpu.memory_space<vmem>>, %arg3: memref<1x128xf32, #tpu.memory_space<vmem>>, %arg4: memref<3x128x128xf32, #tpu.memory_space<vmem>>, %arg5: memref<2x16x128xf32, #tpu.memory_space<vmem>>, %arg6: memref<1x2x128xf32, #tpu.memory_space<vmem>>, %arg7: memref<2x18x128xf32, #tpu.memory_space<vmem>>) attributes {dimension_semantics = [#tpu.dimension_semantics<parallel>], iteration_bounds = array<i64: 1>, scalar_prefetch = 0 : i64, scratch_operands = 1 : i64, tpu.core_type = #tpu.core_type<tc>, window_params = [{transform_indices = @transform_0, window_bounds = array<i64: 2, 16, 128>}, {pipeline_mode = #tpu.pipeline_mode<synchronous>, transform_indices = @transform_1, window_bounds = array<i64: 1, 128>}, {pipeline_mode = #tpu.pipeline_mode<synchronous>, transform_indices = @transform_2, window_bounds = array<i64: 1, 128>}, {pipeline_mode = #tpu.pipeline_mode<synchronous>, transform_indices = @transform_3, window_bounds = array<i64: 3, 128, 128>}, {transform_indices = @transform_4, window_bounds = array<i64: 2, 16, 128>}, {transform_indices = @transform_5, window_bounds = array<i64: 1, 2, 128>}]} {
    %c0 = arith.constant 0 : index
    %c0_0 = arith.constant 0 : index
    %c0_1 = arith.constant 0 : index
    %0 = vector.load %arg1[%c0, %c0_0, %c0_1] : memref<2x16x128xf32, #tpu.memory_space<vmem>>, vector<2x16x128xf32>
    %c0_2 = arith.constant 0 : index
    %c0_3 = arith.constant 0 : index
    %1 = vector.load %arg2[%c0_2, %c0_3] : memref<1x128xf32, #tpu.memory_space<vmem>>, vector<1x128xf32>
    %2 = vector.shape_cast %1 : vector<1x128xf32> to vector<128xf32>
    %3 = vector.shape_cast %2 : vector<128xf32> to vector<1x1x128xf32>
    %4 = vector.broadcast %3 : vector<1x1x128xf32> to vector<2x16x128xf32>
    %5 = arith.mulf %0, %4 : vector<2x16x128xf32>
    %c0_4 = arith.constant 0 : index
    %c0_5 = arith.constant 0 : index
    %6 = vector.load %arg3[%c0_4, %c0_5] : memref<1x128xf32, #tpu.memory_space<vmem>>, vector<1x128xf32>
    %7 = vector.shape_cast %6 : vector<1x128xf32> to vector<128xf32>
    %8 = vector.shape_cast %7 : vector<128xf32> to vector<1x1x128xf32>
    %9 = vector.broadcast %8 : vector<1x1x128xf32> to vector<2x16x128xf32>
    %10 = arith.addf %5, %9 : vector<2x16x128xf32>
    %cst = arith.constant 0.000000e+00 : f32
    %11 = vector.broadcast %cst : f32 to vector<2x16x128xf32>
    %12 = arith.maximumf %10, %11 : vector<2x16x128xf32>
    %cst_6 = arith.constant 0.000000e+00 : f32
    %13 = vector.broadcast %cst_6 : f32 to vector<2x1x128xf32>
    %c0_7 = arith.constant 0 : index
    %c0_8 = arith.constant 0 : index
    %c0_9 = arith.constant 0 : index
    %14 = vector.load %arg7[%c0_7, %c0_8, %c0_9] : memref<2x18x128xf32, #tpu.memory_space<vmem>>, vector<2x1x128xf32>
    tpu.vector_store %arg7[%c0_7, %c0_8, %c0_9], %13 {strides = array<i32>} : memref<2x18x128xf32, #tpu.memory_space<vmem>>, vector<2x1x128xf32>,
    %c0_10 = arith.constant 0 : index
    %c17 = arith.constant 17 : index
    %c0_11 = arith.constant 0 : index
    %15 = vector.load %arg7[%c0_10, %c17, %c0_11] : memref<2x18x128xf32, #tpu.memory_space<vmem>>, vector<2x1x128xf32>
    tpu.vector_store %arg7[%c0_10, %c17, %c0_11], %13 {strides = array<i32>} : memref<2x18x128xf32, #tpu.memory_space<vmem>>, vector<2x1x128xf32>,
    %c0_12 = arith.constant 0 : index
    %c1 = arith.constant 1 : index
    %c0_13 = arith.constant 0 : index
    %16 = vector.load %arg7[%c0_12, %c1, %c0_13] : memref<2x18x128xf32, #tpu.memory_space<vmem>>, vector<2x16x128xf32>
    tpu.vector_store %arg7[%c0_12, %c1, %c0_13], %12 {strides = array<i32>} : memref<2x18x128xf32, #tpu.memory_space<vmem>>, vector<2x16x128xf32>,
    %cst_14 = arith.constant 0.000000e+00 : f32
    %17 = vector.broadcast %cst_14 : f32 to vector<32x128xf32>
    %c0_15 = arith.constant 0 : index
    %c0_16 = arith.constant 0 : index
    %c0_17 = arith.constant 0 : index
    %18 = vector.load %arg7[%c0_15, %c0_16, %c0_17] : memref<2x18x128xf32, #tpu.memory_space<vmem>>, vector<2x16x128xf32>
    %19 = vector.shape_cast %18 : vector<2x16x128xf32> to vector<32x128xf32>
    %c0_18 = arith.constant 0 : index
    %c0_19 = arith.constant 0 : index
    %c0_20 = arith.constant 0 : index
    %20 = vector.load %arg4[%c0_18, %c0_19, %c0_20] : memref<3x128x128xf32, #tpu.memory_space<vmem>>, vector<1x128x128xf32>
    %21 = vector.shape_cast %20 : vector<1x128x128xf32> to vector<128x128xf32>
    %cst_21 = arith.constant dense<0.000000e+00> : vector<32x128xf32>
    %22 = tpu.matmul %19, %21, %cst_21 {dimension_numbers = #tpu.dot_dimension_numbers<[1], [0], [0], [1], [0, 0, 1, 1], [], []>} : vector<32x128xf32>, vector<128x128xf32>, vector<32x128xf32> -> vector<32x128xf32>
    %23 = arith.addf %17, %22 : vector<32x128xf32>
    %c0_22 = arith.constant 0 : index
    %c1_23 = arith.constant 1 : index
    %c0_24 = arith.constant 0 : index
    %24 = vector.load %arg7[%c0_22, %c1_23, %c0_24] : memref<2x18x128xf32, #tpu.memory_space<vmem>>, vector<2x16x128xf32>
    %25 = vector.shape_cast %24 : vector<2x16x128xf32> to vector<32x128xf32>
    %c1_25 = arith.constant 1 : index
    %c0_26 = arith.constant 0 : index
    %c0_27 = arith.constant 0 : index
    %26 = vector.load %arg4[%c1_25, %c0_26, %c0_27] : memref<3x128x128xf32, #tpu.memory_space<vmem>>, vector<1x128x128xf32>
    %27 = vector.shape_cast %26 : vector<1x128x128xf32> to vector<128x128xf32>
    %cst_28 = arith.constant dense<0.000000e+00> : vector<32x128xf32>
    %28 = tpu.matmul %25, %27, %cst_28 {dimension_numbers = #tpu.dot_dimension_numbers<[1], [0], [0], [1], [0, 0, 1, 1], [], []>} : vector<32x128xf32>, vector<128x128xf32>, vector<32x128xf32> -> vector<32x128xf32>
    %29 = arith.addf %23, %28 : vector<32x128xf32>
    %c0_29 = arith.constant 0 : index
    %c2 = arith.constant 2 : index
    %c0_30 = arith.constant 0 : index
    %30 = vector.load %arg7[%c0_29, %c2, %c0_30] : memref<2x18x128xf32, #tpu.memory_space<vmem>>, vector<2x16x128xf32>
    %31 = vector.shape_cast %30 : vector<2x16x128xf32> to vector<32x128xf32>
    %c2_31 = arith.constant 2 : index
    %c0_32 = arith.constant 0 : index
    %c0_33 = arith.constant 0 : index
    %32 = vector.load %arg4[%c2_31, %c0_32, %c0_33] : memref<3x128x128xf32, #tpu.memory_space<vmem>>, vector<1x128x128xf32>
    %33 = vector.shape_cast %32 : vector<1x128x128xf32> to vector<128x128xf32>
    %cst_34 = arith.constant dense<0.000000e+00> : vector<32x128xf32>
    %34 = tpu.matmul %31, %33, %cst_34 {dimension_numbers = #tpu.dot_dimension_numbers<[1], [0], [0], [1], [0, 0, 1, 1], [], []>} : vector<32x128xf32>, vector<128x128xf32>, vector<32x128xf32> -> vector<32x128xf32>
    %35 = arith.addf %29, %34 : vector<32x128xf32>
    %36 = vector.shape_cast %35 : vector<32x128xf32> to vector<2x16x128xf32>
    %c0_35 = arith.constant 0 : index
    %c0_36 = arith.constant 0 : index
    %c0_37 = arith.constant 0 : index
    %37 = vector.load %arg5[%c0_35, %c0_36, %c0_37] : memref<2x16x128xf32, #tpu.memory_space<vmem>>, vector<2x16x128xf32>
    tpu.vector_store %arg5[%c0_35, %c0_36, %c0_37], %36 {strides = array<i32>} : memref<2x16x128xf32, #tpu.memory_space<vmem>>, vector<2x16x128xf32>,
    %cst_38 = arith.constant dense<0.000000e+00> : vector<128xf32>
    %38 = vector.multi_reduction <add>, %35, %cst_38 [0] : vector<32x128xf32> to vector<128xf32>
    %39 = vector.shape_cast %38 : vector<128xf32> to vector<1x128xf32>
    %40 = arith.mulf %35, %35 : vector<32x128xf32>
    %cst_39 = arith.constant dense<0.000000e+00> : vector<128xf32>
    %41 = vector.multi_reduction <add>, %40, %cst_39 [0] : vector<32x128xf32> to vector<128xf32>
    %42 = vector.shape_cast %41 : vector<128xf32> to vector<1x128xf32>
    %43 = tpu.concatenate %39, %42 in 0 : vector<1x128xf32>, vector<1x128xf32> -> vector<2x128xf32>
    %c0_40 = arith.constant 0 : index
    %c0_41 = arith.constant 0 : index
    %c0_42 = arith.constant 0 : index
    %44 = vector.load %arg6[%c0_40, %c0_41, %c0_42] : memref<1x2x128xf32, #tpu.memory_space<vmem>>, vector<1x2x128xf32>
    %45 = vector.shape_cast %44 : vector<1x2x128xf32> to vector<2x128xf32>
    %46 = vector.shape_cast %43 : vector<2x128xf32> to vector<1x2x128xf32>
    tpu.vector_store %arg6[%c0_40, %c0_41, %c0_42], %46 {strides = array<i32>} : memref<1x2x128xf32, #tpu.memory_space<vmem>>, vector<1x2x128xf32>,
    return
  }
  func.func @transform_0(%arg0: i32) -> (i32, i32, i32) {
    %c0_i32 = arith.constant 0 : i32
    %c0_i32_0 = arith.constant 0 : i32
    %c0_i32_1 = arith.constant 0 : i32
    return %arg0, %c0_i32, %c0_i32_0 : i32, i32, i32
  }
  func.func @transform_1(%arg0: i32) -> (i32, i32) {
    %c0_i32 = arith.constant 0 : i32
    %c0_i32_0 = arith.constant 0 : i32
    %c0_i32_1 = arith.constant 0 : i32
    return %c0_i32, %c0_i32_0 : i32, i32
  }
  func.func @transform_2(%arg0: i32) -> (i32, i32) {
    %c0_i32 = arith.constant 0 : i32
    %c0_i32_0 = arith.constant 0 : i32
    %c0_i32_1 = arith.constant 0 : i32
    return %c0_i32, %c0_i32_0 : i32, i32
  }
  func.func @transform_3(%arg0: i32) -> (i32, i32, i32) {
    %c0_i32 = arith.constant 0 : i32
    %c0_i32_0 = arith.constant 0 : i32
    %c0_i32_1 = arith.constant 0 : i32
    %c0_i32_2 = arith.constant 0 : i32
    return %c0_i32, %c0_i32_0, %c0_i32_1 : i32, i32, i32
  }
  func.func @transform_4(%arg0: i32) -> (i32, i32, i32) {
    %c0_i32 = arith.constant 0 : i32
    %c0_i32_0 = arith.constant 0 : i32
    %c0_i32_1 = arith.constant 0 : i32
    return %arg0, %c0_i32, %c0_i32_0 : i32, i32, i32
  }
  func.func @transform_5(%arg0: i32) -> (i32, i32, i32) {
    %c0_i32 = arith.constant 0 : i32
    %c0_i32_0 = arith.constant 0 : i32
    %c0_i32_1 = arith.constant 0 : i32
    return %arg0, %c0_i32, %c0_i32_0 : i32, i32, i32
  }
}

module attributes {stable_mosaic.version = 11 : i64} {
  func.func @_bn_relu_kernel(%arg0: i32, %arg1: memref<2x16x128xf32, #tpu.memory_space<vmem>>, %arg2: memref<1x128xf32, #tpu.memory_space<vmem>>, %arg3: memref<1x128xf32, #tpu.memory_space<vmem>>, %arg4: memref<2x16x128xf32, #tpu.memory_space<vmem>>) attributes {dimension_semantics = [#tpu.dimension_semantics<parallel>], iteration_bounds = array<i64: 1>, scalar_prefetch = 0 : i64, scratch_operands = 0 : i64, tpu.core_type = #tpu.core_type<tc>, window_params = [{transform_indices = @transform_0, window_bounds = array<i64: 2, 16, 128>}, {pipeline_mode = #tpu.pipeline_mode<synchronous>, transform_indices = @transform_1, window_bounds = array<i64: 1, 128>}, {pipeline_mode = #tpu.pipeline_mode<synchronous>, transform_indices = @transform_2, window_bounds = array<i64: 1, 128>}, {transform_indices = @transform_3, window_bounds = array<i64: 2, 16, 128>}]} {
    %c0 = arith.constant 0 : index
    %c0_0 = arith.constant 0 : index
    %c0_1 = arith.constant 0 : index
    %0 = vector.load %arg1[%c0, %c0_0, %c0_1] : memref<2x16x128xf32, #tpu.memory_space<vmem>>, vector<2x16x128xf32>
    %c0_2 = arith.constant 0 : index
    %c0_3 = arith.constant 0 : index
    %1 = vector.load %arg2[%c0_2, %c0_3] : memref<1x128xf32, #tpu.memory_space<vmem>>, vector<1x128xf32>
    %2 = vector.shape_cast %1 : vector<1x128xf32> to vector<128xf32>
    %3 = vector.shape_cast %2 : vector<128xf32> to vector<1x1x128xf32>
    %4 = vector.broadcast %3 : vector<1x1x128xf32> to vector<2x16x128xf32>
    %5 = arith.mulf %0, %4 : vector<2x16x128xf32>
    %c0_4 = arith.constant 0 : index
    %c0_5 = arith.constant 0 : index
    %6 = vector.load %arg3[%c0_4, %c0_5] : memref<1x128xf32, #tpu.memory_space<vmem>>, vector<1x128xf32>
    %7 = vector.shape_cast %6 : vector<1x128xf32> to vector<128xf32>
    %8 = vector.shape_cast %7 : vector<128xf32> to vector<1x1x128xf32>
    %9 = vector.broadcast %8 : vector<1x1x128xf32> to vector<2x16x128xf32>
    %10 = arith.addf %5, %9 : vector<2x16x128xf32>
    %cst = arith.constant 0.000000e+00 : f32
    %11 = vector.broadcast %cst : f32 to vector<2x16x128xf32>
    %12 = arith.maximumf %10, %11 : vector<2x16x128xf32>
    %c0_6 = arith.constant 0 : index
    %c0_7 = arith.constant 0 : index
    %c0_8 = arith.constant 0 : index
    %13 = vector.load %arg4[%c0_6, %c0_7, %c0_8] : memref<2x16x128xf32, #tpu.memory_space<vmem>>, vector<2x16x128xf32>
    tpu.vector_store %arg4[%c0_6, %c0_7, %c0_8], %12 {strides = array<i32>} : memref<2x16x128xf32, #tpu.memory_space<vmem>>, vector<2x16x128xf32>,
    return
  }
  func.func @transform_0(%arg0: i32) -> (i32, i32, i32) {
    %c0_i32 = arith.constant 0 : i32
    %c0_i32_0 = arith.constant 0 : i32
    %c0_i32_1 = arith.constant 0 : i32
    return %arg0, %c0_i32, %c0_i32_0 : i32, i32, i32
  }
  func.func @transform_1(%arg0: i32) -> (i32, i32) {
    %c0_i32 = arith.constant 0 : i32
    %c0_i32_0 = arith.constant 0 : i32
    %c0_i32_1 = arith.constant 0 : i32
    return %c0_i32, %c0_i32_0 : i32, i32
  }
  func.func @transform_2(%arg0: i32) -> (i32, i32) {
    %c0_i32 = arith.constant 0 : i32
    %c0_i32_0 = arith.constant 0 : i32
    %c0_i32_1 = arith.constant 0 : i32
    return %c0_i32, %c0_i32_0 : i32, i32
  }
  func.func @transform_3(%arg0: i32) -> (i32, i32, i32) {
    %c0_i32 = arith.constant 0 : i32
    %c0_i32_0 = arith.constant 0 : i32
    %c0_i32_1 = arith.constant 0 : i32
    return %arg0, %c0_i32, %c0_i32_0 : i32, i32, i32
  }
}

</mosaic_0001>

<llo_original>
// kernel: tile.22
$region0: #{tile.22}
  #allocation0 [shape = 's32[1]{0}', space=sflag, size = 0x4, scoped, tag = 'scoped memory for tile.22']
  %s0 = inlined_call_operand.<no memory space> [shape: f32[], index: 0, kind: input, shape index: {}]
  %s1 = inlined_call_operand.vmem [shape: f32[1,64], index: 1, kind: output, shape index: {}]
  %v2 = vstv %s0
  %3 = vst [vmem:[%s1] sm:$0x1] %v2

// kernel: conv_block_forward.3
$region0: #{conv_block_forward.3}
  #allocation0 [shape = 'u32[]', space=smem, size = 0x4, offset = 0x4, fixed_abs, tag = 'smem constant byte address 0x4 - core index']
  #allocation1 [shape = 'u32[144,128]{1,0:T(1,128)}', space=vmem, size = 0x12000, scoped, tag = 'internal scratch']
  #allocation2 [shape = 'f32[2,18,64]{2,1,0:T(8,128)}', space=vmem, size = 0x6000, scoped, tag = 'scratch operand']
  %s0 = inlined_call_operand.vmem [shape: f32[2,16,64], index: 0, kind: input, shape index: {}]
  %s1 = inlined_call_operand.vmem [shape: f32[1,64], index: 1, kind: input, shape index: {}]
  %s2 = inlined_call_operand.vmem [shape: f32[1,64], index: 2, kind: input, shape index: {}]
  %s3 = inlined_call_operand.vmem [shape: f32[3,64,128], index: 3, kind: input, shape index: {}]
  %s4 = inlined_call_operand.vmem [shape: f32[2,16,128], index: 4, kind: output, shape index: {0}]
  %s5 = inlined_call_operand.vmem [shape: f32[1,2,128], index: 5, kind: output, shape index: {1}]
  %6 = xla_tuple %s4, %s5
  %s7 = sld [smem:[#allocation0]]
  $region34: #{conv_block_forward.3} parent=0
    _
  %s9 = ssub.s32 1, %s7
  %s10 = scalar_select 0, %s9, %s7
  // Predicated region
  $region2: #{conv_block_forward.3} parent=0 // pred_check
    _
  $region3: #{conv_block_forward.3} parent=0 // pred_check_branch
    %12 = sbr.rel (0) target = $region5
  $region4: #{conv_block_forward.3} parent=0 // pred_region
    _
  $region5: #{conv_block_forward.3} parent=0 // pred_fallthru
    _
  // Predicated region
  $region6: #{conv_block_forward.3} parent=0 // pred_check
    _
  $region7: #{conv_block_forward.3} parent=0 // pred_check_branch
    %14 = sbr.rel (0) target = $region9
  $region8: #{conv_block_forward.3} parent=0 // pred_region
    _
  $region9: #{conv_block_forward.3} parent=0 // pred_fallthru
    _
  // Predicated region
  $region10: #{conv_block_forward.3} parent=0 // pred_check
    _
  $region11: #{conv_block_forward.3} parent=0 // pred_check_branch
    %16 = sbr.rel (0) target = $region13
  $region12: #{conv_block_forward.3} parent=0 // pred_region
    _
  $region13: #{conv_block_forward.3} parent=0 // pred_fallthru
    _
  // Predicated region
  $region14: #{conv_block_forward.3} parent=0 // pred_check
    _
  $region15: #{conv_block_forward.3} parent=0 // pred_check_branch
    %18 = sbr.rel (0) target = $region17
  $region16: #{conv_block_forward.3} parent=0 // pred_region
    _
  $region17: #{conv_block_forward.3} parent=0 // pred_fallthru
    _
  %v19 = vld [vmem:[%s0] sm:$0xff]
  %v20 = vld [vmem:[%s0 + $0x8] sm:$0xff]
  %v21 = vld [vmem:[%s0 + $0x10] sm:$0xff]
  %v22 = vld [vmem:[%s0 + $0x18] sm:$0xff]
  %vm23 = vcmask 516096
  %24 = vst.msk [vmem:[#allocation2] sm:$0x1] %vm23, 0.0
  %25 = vst.msk [vmem:[#allocation2 + $0x18] sm:$0x1] %vm23, 0.0
  %26 = vst.msk [vmem:[#allocation2 + $0x11] sm:$0x1] %vm23, 0.0
  %27 = vst.msk [vmem:[#allocation2 + $0x29] sm:$0x1] %vm23, 0.0
  %vm28 = vcmask 523264
  %29 = vst.msk [vmem:[#allocation2 + $0x1] sm:$0xff] %vm28, %v19
  %30 = vst.msk [vmem:[#allocation2 + $0x9] sm:$0xff] %vm28, %v20
  %31 = vst.msk [vmem:[#allocation2 + $0x19] sm:$0xff] %vm28, %v21
  %32 = vst.msk [vmem:[#allocation2 + $0x21] sm:$0xff] %vm28, %v22
  %v33 = vld [vmem:[#allocation2] sm:$0xff]
  %v34 = vld [vmem:[#allocation2 + $0x8] sm:$0xff]
  %v35 = vld [vmem:[#allocation2 + $0x18] sm:$0xff]
  %v36 = vld [vmem:[#allocation2 + $0x20] sm:$0xff]
  %v37 = vld [vmem:[%s3] sm:$0xff]
  %v38 = vld [vmem:[%s3 + $0x8] sm:$0xff]
  %v39 = vld [vmem:[%s3 + $0x10] sm:$0xff]
  %v40 = vld [vmem:[%s3 + $0x18] sm:$0xff]
  %v41 = vld [vmem:[%s3 + $0x20] sm:$0xff]
  %v42 = vld [vmem:[%s3 + $0x28] sm:$0xff]
  %v43 = vld [vmem:[%s3 + $0x30] sm:$0xff]
  %v44 = vld [vmem:[%s3 + $0x38] sm:$0xff]
  %v45 = vld [vmem:[#allocation2 + $0x1] sm:$0xff]
  %v46 = vld [vmem:[#allocation2 + $0x9] sm:$0xff]
  %v47 = vld [vmem:[#allocation2 + $0x19] sm:$0xff]
  %v48 = vld [vmem:[#allocation2 + $0x21] sm:$0xff]
  %s49 = scalar_lea.vmem %s3, 64
  %v50 = vld [vmem:[%s49] sm:$0xff]
  %v51 = vld [vmem:[%s49 + $0x8] sm:$0xff]
  %v52 = vld [vmem:[%s49 + $0x10] sm:$0xff]
  %v53 = vld [vmem:[%s49 + $0x18] sm:$0xff]
  %v54 = vld [vmem:[%s49 + $0x20] sm:$0xff]
  %v55 = vld [vmem:[%s49 + $0x28] sm:$0xff]
  %v56 = vld [vmem:[%s49 + $0x30] sm:$0xff]
  %v57 = vld [vmem:[%s49 + $0x38] sm:$0xff]
  %v59 = vsel %vm28, %v45, 0
  %v62 = vsel %vm28, %v46, 0
  %v65 = vsel %vm28, %v47, 0
  %v68 = vsel %vm28, %v48, 0
  %70 = vmatprep.subr.mxu0 0.0
  %71 = vmatpush1.msra.mxu0 %v50
  %72 = vmatprep.subr.mxu0 0.0
  %73 = vmatpush1.msra.mxu0 %v51
  %74 = vmatprep.subr.mxu0 0.0
  %75 = vmatpush1.msra.mxu0 %v52
  %76 = vmatprep.subr.mxu0 0.0
  %77 = vmatpush1.msra.mxu0 %v53
  %78 = vmatprep.subr.mxu0 0.0
  %79 = vmatpush1.msra.mxu0 %v54
  %80 = vmatprep.subr.mxu0 0.0
  %81 = vmatpush1.msra.mxu0 %v55
  %82 = vmatprep.subr.mxu0 0.0
  %83 = vmatpush1.msra.mxu0 %v56
  %84 = vmatprep.subr.mxu0 0.0
  %85 = vmatpush1.msra.mxu0 %v57
  %86 = vmatprep.subr.mxu0 0.0
  %87 = vmatpush1.msra.mxu0 0.0
  %88 = vmatprep.subr.mxu0 0.0
  %89 = vmatpush1.msra.mxu0 0.0
  %90 = vmatprep.subr.mxu0 0.0
  %91 = vmatpush1.msra.mxu0 0.0
  %92 = vmatprep.subr.mxu0 0.0
  %93 = vmatpush1.msra.mxu0 0.0
  %94 = vmatprep.subr.mxu0 0.0
  %95 = vmatpush1.msra.mxu0 0.0
  %96 = vmatprep.subr.mxu0 0.0
  %97 = vmatpush1.msra.mxu0 0.0
  %98 = vmatprep.subr.mxu0 0.0
  %99 = vmatpush1.msra.mxu0 0.0
  %100 = vmatprep.subr.mxu0 0.0
  %101 = vmatpush1.msra.mxu0 0.0
  %102 = vmatprep.subr.mxu0 0.0
  %103 = vmatpush1.msra.mxu0 0.0
  %104 = vmatprep.subr.mxu0 0.0
  %105 = vmatpush1.msra.mxu0 0.0
  %106 = vmatprep.subr.mxu0 0.0
  %107 = vmatpush1.msra.mxu0 0.0
  %108 = vmatprep.subr.mxu0 0.0
  %109 = vmatpush1.msra.mxu0 0.0
  %110 = vmatprep.subr.mxu0 0.0
  %111 = vmatpush1.msra.mxu0 0.0
  %112 = vmatprep.subr.mxu0 0.0
  %113 = vmatpush1.msra.mxu0 0.0
  %114 = vmatprep.subr.mxu0 0.0
  %115 = vmatpush1.msra.mxu0 0.0
  %116 = vmatprep.subr.mxu0 0.0
  %117 = vmatpush1.msra.mxu0 0.0
  %118 = vmatprep.subr.mxu0 0.0
  %119 = vmatpush1.msra.mxu0 0.0
  %120 = vmatprep.subr.mxu0 0.0
  %121 = vmatpush1.msra.mxu0 0.0
  %122 = vmatprep.subr.mxu0 0.0
  %123 = vmatpush1.msra.mxu0 0.0
  %124 = vmatprep.subr.mxu0 0.0
  %125 = vmatpush1.msra.mxu0 0.0
  %126 = vmatprep.subr.mxu0 0.0
  %127 = vmatpush1.msra.mxu0 0.0
  %128 = vmatprep.subr.mxu0 0.0
  %129 = vmatpush1.msra.mxu0 0.0
  %130 = vmatprep.subr.mxu0 0.0
  %131 = vmatpush1.msra.mxu0 0.0
  %132 = vmatprep.subr.mxu0 0.0
  %133 = vmatpush1.msra.mxu0 0.0
  %134 = vmatprep.mubr.f32.mxu0 0.0
  %135 = vmatmul.mubr.f32.gmra.mrb[0].mxu0 %v59
  %v136 = vpop.f32.mrb[0].mxu0
  %v137 = vadd.f32 0.0, %v136
  %v138 = vpop.f32.mrb[0].mxu0
  %139 = vmatprep.mubr.f32.mxu0 0.0
  %140 = vmatmul.mubr.f32.gmra.mrb[0].mxu0 %v62
  %v141 = vpop.f32.mrb[0].mxu0
  %v142 = vadd.f32 0.0, %v141
  %v143 = vpop.f32.mrb[0].mxu0
  %144 = vmatprep.mubr.f32.mxu0 0.0
  %145 = vmatmul.mubr.f32.gmra.mrb[0].mxu0 %v65
  %v146 = vpop.f32.mrb[0].mxu0
  %v147 = vadd.f32 0.0, %v146
  %v148 = vpop.f32.mrb[0].mxu0
  %149 = vmatprep.mubr.f32.mxu0 0.0
  %150 = vmatmul.mubr.f32.gmra.mrb[0].mxu0 %v68
  %v151 = vpop.f32.mrb[0].mxu0
  %v152 = vadd.f32 0.0, %v151
  %v153 = vpop.f32.mrb[0].mxu0
  %154 = vdwg.mxu0
  %v156 = vsel %vm28, %v33, 0
  %v159 = vsel %vm28, %v34, 0
  %v162 = vsel %vm28, %v35, 0
  %v165 = vsel %vm28, %v36, 0
  %167 = vmatprep.subr.mxu0 0.0
  %168 = vmatpush1.msra.mxu0 %v37
  %169 = vmatprep.subr.mxu0 0.0
  %170 = vmatpush1.msra.mxu0 %v38
  %171 = vmatprep.subr.mxu0 0.0
  %172 = vmatpush1.msra.mxu0 %v39
  %173 = vmatprep.subr.mxu0 0.0
  %174 = vmatpush1.msra.mxu0 %v40
  %175 = vmatprep.subr.mxu0 0.0
  %176 = vmatpush1.msra.mxu0 %v41
  %177 = vmatprep.subr.mxu0 0.0
  %178 = vmatpush1.msra.mxu0 %v42
  %179 = vmatprep.subr.mxu0 0.0
  %180 = vmatpush1.msra.mxu0 %v43
  %181 = vmatprep.subr.mxu0 0.0
  %182 = vmatpush1.msra.mxu0 %v44
  %183 = vmatprep.subr.mxu0 0.0
  %184 = vmatpush1.msra.mxu0 0.0
  %185 = vmatprep.subr.mxu0 0.0
  %186 = vmatpush1.msra.mxu0 0.0
  %187 = vmatprep.subr.mxu0 0.0
  %188 = vmatpush1.msra.mxu0 0.0
  %189 = vmatprep.subr.mxu0 0.0
  %190 = vmatpush1.msra.mxu0 0.0
  %191 = vmatprep.subr.mxu0 0.0
  %192 = vmatpush1.msra.mxu0 0.0
  %193 = vmatprep.subr.mxu0 0.0
  %194 = vmatpush1.msra.mxu0 0.0
  %195 = vmatprep.subr.mxu0 0.0
  %196 = vmatpush1.msra.mxu0 0.0
  %197 = vmatprep.subr.mxu0 0.0
  %198 = vmatpush1.msra.mxu0 0.0
  %199 = vmatprep.subr.mxu0 0.0
  %200 = vmatpush1.msra.mxu0 0.0
  %201 = vmatprep.subr.mxu0 0.0
  %202 = vmatpush1.msra.mxu0 0.0
  %203 = vmatprep.subr.mxu0 0.0
  %204 = vmatpush1.msra.mxu0 0.0
  %205 = vmatprep.subr.mxu0 0.0
  %206 = vmatpush1.msra.mxu0 0.0
  %207 = vmatprep.subr.mxu0 0.0
  %208 = vmatpush1.msra.mxu0 0.0
  %209 = vmatprep.subr.mxu0 0.0
  %210 = vmatpush1.msra.mxu0 0.0
  %211 = vmatprep.subr.mxu0 0.0
  %212 = vmatpush1.msra.mxu0 0.0
  %213 = vmatprep.subr.mxu0 0.0
  %214 = vmatpush1.msra.mxu0 0.0
  %215 = vmatprep.subr.mxu0 0.0
  %216 = vmatpush1.msra.mxu0 0.0
  %217 = vmatprep.subr.mxu0 0.0
  %218 = vmatpush1.msra.mxu0 0.0
  %219 = vmatprep.subr.mxu0 0.0
  %220 = vmatpush1.msra.mxu0 0.0
  %221 = vmatprep.subr.mxu0 0.0
  %222 = vmatpush1.msra.mxu0 0.0
  %223 = vmatprep.subr.mxu0 0.0
  %224 = vmatpush1.msra.mxu0 0.0
  %225 = vmatprep.subr.mxu0 0.0
  %226 = vmatpush1.msra.mxu0 0.0
  %227 = vmatprep.subr.mxu0 0.0
  %228 = vmatpush1.msra.mxu0 0.0
  %229 = vmatprep.subr.mxu0 0.0
  %230 = vmatpush1.msra.mxu0 0.0
  %231 = vmatprep.mubr.f32.mxu0 0.0
  %232 = vmatmul.mubr.f32.gmra.mrb[0].mxu0 %v156
  %v233 = vpop.f32.mrb[0].mxu0
  %v234 = vadd.f32 %v137, %v233
  %v235 = vpop.f32.mrb[0].mxu0
  %236 = vmatprep.mubr.f32.mxu0 0.0
  %237 = vmatmul.mubr.f32.gmra.mrb[0].mxu0 %v159
  %v238 = vpop.f32.mrb[0].mxu0
  %v239 = vadd.f32 %v142, %v238
  %v240 = vpop.f32.mrb[0].mxu0
  %241 = vmatprep.mubr.f32.mxu0 0.0
  %242 = vmatmul.mubr.f32.gmra.mrb[0].mxu0 %v162
  %v243 = vpop.f32.mrb[0].mxu0
  %v244 = vadd.f32 %v147, %v243
  %v245 = vpop.f32.mrb[0].mxu0
  %246 = vmatprep.mubr.f32.mxu0 0.0
  %247 = vmatmul.mubr.f32.gmra.mrb[0].mxu0 %v165
  %v248 = vpop.f32.mrb[0].mxu0
  %v249 = vadd.f32 %v152, %v248
  %v250 = vpop.f32.mrb[0].mxu0
  %251 = vdwg.mxu0
  %v252 = vld [vmem:[#allocation2 + $0x2] sm:$0xff]
  %v253 = vld [vmem:[#allocation2 + $0xa] sm:$0xff]
  %v254 = vld [vmem:[#allocation2 + $0x1a] sm:$0xff]
  %v255 = vld [vmem:[#allocation2 + $0x22] sm:$0xff]
  %s256 = scalar_lea.vmem %s3, 128
  %v257 = vld [vmem:[%s256] sm:$0xff]
  %v258 = vld [vmem:[%s256 + $0x8] sm:$0xff]
  %v259 = vld [vmem:[%s256 + $0x10] sm:$0xff]
  %v260 = vld [vmem:[%s256 + $0x18] sm:$0xff]
  %v261 = vld [vmem:[%s256 + $0x20] sm:$0xff]
  %v262 = vld [vmem:[%s256 + $0x28] sm:$0xff]
  %v263 = vld [vmem:[%s256 + $0x30] sm:$0xff]
  %v264 = vld [vmem:[%s256 + $0x38] sm:$0xff]
  %v266 = vsel %vm28, %v252, 0
  %v269 = vsel %vm28, %v253, 0
  %v272 = vsel %vm28, %v254, 0
  %v275 = vsel %vm28, %v255, 0
  %277 = vmatprep.subr.mxu0 0.0
  %278 = vmatpush1.msra.mxu0 %v257
  %279 = vmatprep.subr.mxu0 0.0
  %280 = vmatpush1.msra.mxu0 %v258
  %281 = vmatprep.subr.mxu0 0.0
  %282 = vmatpush1.msra.mxu0 %v259
  %283 = vmatprep.subr.mxu0 0.0
  %284 = vmatpush1.msra.mxu0 %v260
  %285 = vmatprep.subr.mxu0 0.0
  %286 = vmatpush1.msra.mxu0 %v261
  %287 = vmatprep.subr.mxu0 0.0
  %288 = vmatpush1.msra.mxu0 %v262
  %289 = vmatprep.subr.mxu0 0.0
  %290 = vmatpush1.msra.mxu0 %v263
  %291 = vmatprep.subr.mxu0 0.0
  %292 = vmatpush1.msra.mxu0 %v264
  %293 = vmatprep.subr.mxu0 0.0
  %294 = vmatpush1.msra.mxu0 0.0
  %295 = vmatprep.subr.mxu0 0.0
  %296 = vmatpush1.msra.mxu0 0.0
  %297 = vmatprep.subr.mxu0 0.0
  %298 = vmatpush1.msra.mxu0 0.0
  %299 = vmatprep.subr.mxu0 0.0
  %300 = vmatpush1.msra.mxu0 0.0
  %301 = vmatprep.subr.mxu0 0.0
  %302 = vmatpush1.msra.mxu0 0.0
  %303 = vmatprep.subr.mxu0 0.0
  %304 = vmatpush1.msra.mxu0 0.0
  %305 = vmatprep.subr.mxu0 0.0
  %306 = vmatpush1.msra.mxu0 0.0
  %307 = vmatprep.subr.mxu0 0.0
  %308 = vmatpush1.msra.mxu0 0.0
  %309 = vmatprep.subr.mxu0 0.0
  %310 = vmatpush1.msra.mxu0 0.0
  %311 = vmatprep.subr.mxu0 0.0
  %312 = vmatpush1.msra.mxu0 0.0
  %313 = vmatprep.subr.mxu0 0.0
  %314 = vmatpush1.msra.mxu0 0.0
  %315 = vmatprep.subr.mxu0 0.0
  %316 = vmatpush1.msra.mxu0 0.0
  %317 = vmatprep.subr.mxu0 0.0
  %318 = vmatpush1.msra.mxu0 0.0
  %319 = vmatprep.subr.mxu0 0.0
  %320 = vmatpush1.msra.mxu0 0.0
  %321 = vmatprep.subr.mxu0 0.0
  %322 = vmatpush1.msra.mxu0 0.0
  %323 = vmatprep.subr.mxu0 0.0
  %324 = vmatpush1.msra.mxu0 0.0
  %325 = vmatprep.subr.mxu0 0.0
  %326 = vmatpush1.msra.mxu0 0.0
  %327 = vmatprep.subr.mxu0 0.0
  %328 = vmatpush1.msra.mxu0 0.0
  %329 = vmatprep.subr.mxu0 0.0
  %330 = vmatpush1.msra.mxu0 0.0
  %331 = vmatprep.subr.mxu0 0.0
  %332 = vmatpush1.msra.mxu0 0.0
  %333 = vmatprep.subr.mxu0 0.0
  %334 = vmatpush1.msra.mxu0 0.0
  %335 = vmatprep.subr.mxu0 0.0
  %336 = vmatpush1.msra.mxu0 0.0
  %337 = vmatprep.subr.mxu0 0.0
  %338 = vmatpush1.msra.mxu0 0.0
  %339 = vmatprep.subr.mxu0 0.0
  %340 = vmatpush1.msra.mxu0 0.0
  %341 = vmatprep.mubr.f32.mxu0 0.0
  %342 = vmatmul.mubr.f32.gmra.mrb[0].mxu0 %v266
  %v343 = vpop.f32.mrb[0].mxu0
  %v344 = vadd.f32 0.0, %v343
  %v345 = vpop.f32.mrb[0].mxu0
  %346 = vmatprep.mubr.f32.mxu0 0.0
  %347 = vmatmul.mubr.f32.gmra.mrb[0].mxu0 %v269
  %v348 = vpop.f32.mrb[0].mxu0
  %v349 = vadd.f32 0.0, %v348
  %v350 = vpop.f32.mrb[0].mxu0
  %351 = vmatprep.mubr.f32.mxu0 0.0
  %352 = vmatmul.mubr.f32.gmra.mrb[0].mxu0 %v272
  %v353 = vpop.f32.mrb[0].mxu0
  %v354 = vadd.f32 0.0, %v353
  %v355 = vpop.f32.mrb[0].mxu0
  %356 = vmatprep.mubr.f32.mxu0 0.0
  %357 = vmatmul.mubr.f32.gmra.mrb[0].mxu0 %v275
  %v358 = vpop.f32.mrb[0].mxu0
  %v359 = vadd.f32 0.0, %v358
  %v360 = vpop.f32.mrb[0].mxu0
  %361 = vdwg.mxu0
  %v362 = vadd.f32 %v234, %v344
  %v363 = vadd.f32 %v239, %v349
  %v364 = vadd.f32 %v244, %v354
  %v365 = vadd.f32 %v249, %v359
  %366 = vst [vmem:[%s4] sm:$0xff] %v362
  %367 = vst [vmem:[%s4 + $0x8] sm:$0xff] %v363
  %368 = vst [vmem:[%s4 + $0x10] sm:$0xff] %v364
  %369 = vst [vmem:[%s4 + $0x18] sm:$0xff] %v365
  %v370 = vadd.f32 %v362, %v363
  %v371 = vadd.f32 %v370, %v364
  %v372 = vadd.f32 %v371, %v365
  %v373 = vrot.slane %v372, 4
  %v374 = vadd.f32 %v372, %v373
  %v375 = vrot.slane %v374, 2
  %v376 = vadd.f32 %v374, %v375
  %v377 = vrot.slane %v376, 1
  %v378 = vadd.f32 %v376, %v377
  %v379 = vmul.f32 %v362, %v362
  %v380 = vmul.f32 %v363, %v363
  %v381 = vmul.f32 %v364, %v364
  %v382 = vmul.f32 %v365, %v365
  %v383 = vadd.f32 %v379, %v380
  %v384 = vadd.f32 %v383, %v381
  %v385 = vadd.f32 %v384, %v382
  %v386 = vrot.slane %v385, 4
  %v387 = vadd.f32 %v385, %v386
  %v388 = vrot.slane %v387, 2
  %v389 = vadd.f32 %v387, %v388
  %v390 = vrot.slane %v389, 1
  %v391 = vadd.f32 %v389, %v390
  %vm392 = vcmask 1040384
  %v393 = vsel %vm392, %v378, %v391
  %394 = vst [vmem:[%s5] sm:$0x3] %v393
  // Predicated region
  $region18: #{conv_block_forward.3} parent=0 // pred_check
    _
  $region19: #{conv_block_forward.3} parent=0 // pred_check_branch
    %396 = sbr.rel (0) target = $region21
  $region20: #{conv_block_forward.3} parent=0 // pred_region
    _
  $region21: #{conv_block_forward.3} parent=0 // pred_fallthru
    _
  // Predicated region
  $region22: #{conv_block_forward.3} parent=0 // pred_check
    _
  $region23: #{conv_block_forward.3} parent=0 // pred_check_branch
    %398 = sbr.rel (0) target = $region25
  $region24: #{conv_block_forward.3} parent=0 // pred_region
    _
  $region25: #{conv_block_forward.3} parent=0 // pred_fallthru
    _
  // Predicated region
  $region26: #{conv_block_forward.3} parent=0 // pred_check
    _
  $region27: #{conv_block_forward.3} parent=0 // pred_check_branch
    %400 = sbr.rel (0) target = $region29
  $region28: #{conv_block_forward.3} parent=0 // pred_region
    _
  $region29: #{conv_block_forward.3} parent=0 // pred_fallthru
    _
  // Predicated region
  $region30: #{conv_block_forward.3} parent=0 // pred_check
    _
  $region31: #{conv_block_forward.3} parent=0 // pred_check_branch
    %402 = sbr.rel (0) target = $region33
  $region32: #{conv_block_forward.3} parent=0 // pred_region
    _
  $region33: #{conv_block_forward.3} parent=0 // pred_fallthru
    _

// kernel: tile.32
$region0: #{tile.32}
  #allocation0 [shape = 's32[1]{0}', space=sflag, size = 0x4, scoped, tag = 'scoped memory for tile.32']
  %s0 = inlined_call_operand.vmem [shape: f32[8], index: 0, kind: input, shape index: {}]
  %s1 = inlined_call_operand.vmem [shape: f32[16,8], index: 1, kind: output, shape index: {}]
  // Predicated region
  $region2: #{tile.32} parent=0 // pred_check
    _
  $region3: #{tile.32} parent=0 // pred_check_branch
    %3 = sbr.rel (0) target = $region5
  $region4: #{tile.32} parent=0 // pred_region
    _
  $region5: #{tile.32} parent=0 // pred_fallthru
    _
  %v4 = vld [vmem:[%s0] ss:$0 sm:$0xff]
  %5 = vst [vmem:[%s1] sm:$0xff] %v4
  %s6 = scalar_lea.vmem %s1, 8
  %7 = vst [vmem:[%s6] sm:$0xff] %v4

// kernel: tile.33
$region0: #{tile.33}
  %s0 = inlined_call_operand.vmem [shape: f32[16,8], index: 0, kind: input, shape index: {}]
  %s1 = inlined_call_operand.vmem [shape: f32[1,128], index: 1, kind: output, shape index: {}]
  $region1: #{tile.33} parent=0
    #allocation0 [shape = 'u8[4096]{0}', space=vmem, size = 0x1000, scoped, tag = 'scoped mem for output reshape']
    %v2 = vld [vmem:[%s0] sm:$0x1]
    %vm3 = vcmask 64512
    %4 = vst.msk [vmem:[#allocation0] sm:$0x1] %vm3, %v2
    %s5 = scalar_lea.vmem %s0, 15
    %v6 = vld [vmem:[%s5] sm:$0x1]
    %7 = vrot.lane.b32.xlu0 %v6, 120
    %v8 = vpop.permute.xlu0 %7
    %vm9 = vcmask 1048512
    %10 = vst.msk [vmem:[#allocation0] sm:$0x1] %vm9, %v8
    %s11 = scalar_lea.vmem %s0, 14
    %v12 = vld [vmem:[%s11] sm:$0x1]
    %13 = vrot.lane.b32.xlu0 %v12, 112
    %v14 = vpop.permute.xlu0 %13
    %vm15 = vcmask 982912
    %16 = vst.msk [vmem:[#allocation0] sm:$0x1] %vm15, %v14
    %s17 = scalar_lea.vmem %s0, 13
    %v18 = vld [vmem:[%s17] sm:$0x1]
    %19 = vrot.lane.b32.xlu0 %v18, 104
    %v20 = vpop.permute.xlu0 %19
    %vm21 = vcmask 917312
    %22 = vst.msk [vmem:[#allocation0] sm:$0x1] %vm21, %v20
    %s23 = scalar_lea.vmem %s0, 12
    %v24 = vld [vmem:[%s23] sm:$0x1]
    %25 = vrot.lane.b32.xlu0 %v24, 96
    %v26 = vpop.permute.xlu0 %25
    %vm27 = vcmask 851712
    %28 = vst.msk [vmem:[#allocation0] sm:$0x1] %vm27, %v26
    %s29 = scalar_lea.vmem %s0, 11
    %v30 = vld [vmem:[%s29] sm:$0x1]
    %31 = vrot.lane.b32.xlu0 %v30, 88
    %v32 = vpop.permute.xlu0 %31
    %vm33 = vcmask 786112
    %34 = vst.msk [vmem:[#allocation0] sm:$0x1] %vm33, %v32
    %s35 = scalar_lea.vmem %s0, 10
    %v36 = vld [vmem:[%s35] sm:$0x1]
    %37 = vrot.lane.b32.xlu0 %v36, 80
    %v38 = vpop.permute.xlu0 %37
    %vm39 = vcmask 720512
    %40 = vst.msk [vmem:[#allocation0] sm:$0x1] %vm39, %v38
    %s41 = scalar_lea.vmem %s0, 9
    %v42 = vld [vmem:[%s41] sm:$0x1]
    %43 = vrot.lane.b32.xlu0 %v42, 72
    %v44 = vpop.permute.xlu0 %43
    %vm45 = vcmask 654912
    %46 = vst.msk [vmem:[#allocation0] sm:$0x1] %vm45, %v44
    %s47 = scalar_lea.vmem %s0, 8
    %v48 = vld [vmem:[%s47] sm:$0x1]
    %49 = vrot.lane.b32.xlu0 %v48, 64
    %v50 = vpop.permute.xlu0 %49
    %vm51 = vcmask 589312
    %52 = vst.msk [vmem:[#allocation0] sm:$0x1] %vm51, %v50
    %s53 = scalar_lea.vmem %s0, 7
    %v54 = vld [vmem:[%s53] sm:$0x1]
    %55 = vrot.lane.b32.xlu0 %v54, 56
    %v56 = vpop.permute.xlu0 %55
    %vm57 = vcmask 523712
    %58 = vst.msk [vmem:[#allocation0] sm:$0x1] %vm57, %v56
    %s59 = scalar_lea.vmem %s0, 6
    %v60 = vld [vmem:[%s59] sm:$0x1]
    %61 = vrot.lane.b32.xlu0 %v60, 48
    %v62 = vpop.permute.xlu0 %61
    %vm63 = vcmask 458112
    %64 = vst.msk [vmem:[#allocation0] sm:$0x1] %vm63, %v62
    %s65 = scalar_lea.vmem %s0, 5
    %v66 = vld [vmem:[%s65] sm:$0x1]
    %67 = vrot.lane.b32.xlu0 %v66, 40
    %v68 = vpop.permute.xlu0 %67
    %vm69 = vcmask 392512
    %70 = vst.msk [vmem:[#allocation0] sm:$0x1] %vm69, %v68
    %s71 = scalar_lea.vmem %s0, 4
    %v72 = vld [vmem:[%s71] sm:$0x1]
    %73 = vrot.lane.b32.xlu0 %v72, 32
    %v74 = vpop.permute.xlu0 %73
    %vm75 = vcmask 326912
    %76 = vst.msk [vmem:[#allocation0] sm:$0x1] %vm75, %v74
    %s77 = scalar_lea.vmem %s0, 3
    %v78 = vld [vmem:[%s77] sm:$0x1]
    %79 = vrot.lane.b32.xlu0 %v78, 24
    %v80 = vpop.permute.xlu0 %79
    %vm81 = vcmask 261312
    %82 = vst.msk [vmem:[#allocation0] sm:$0x1] %vm81, %v80
    %s83 = scalar_lea.vmem %s0, 2
    %v84 = vld [vmem:[%s83] sm:$0x1]
    %85 = vrot.lane.b32.xlu0 %v84, 16
    %v86 = vpop.permute.xlu0 %85
    %vm87 = vcmask 195712
    %88 = vst.msk [vmem:[#allocation0] sm:$0x1] %vm87, %v86
    %s89 = scalar_lea.vmem %s0, 1
    %v90 = vld [vmem:[%s89] sm:$0x1]
    %91 = vrot.lane.b32.xlu0 %v90, 8
    %v92 = vpop.permute.xlu0 %91
    %vm93 = vcmask 130112
    %94 = vst.msk [vmem:[#allocation0] sm:$0x1] %vm93, %v92
    %s96 = sshllo.u32 0, 1
    %v98 = vld [vmem:[#allocation0] sm:%s96]
    %s99 = sshllo.u32 0, 1
    %100 = vst [vmem:[%s1] sm:%s99] %v98

// kernel: conv_block_forward.4
$region0: #{conv_block_forward.4}
  #allocation0 [shape = 'u32[]', space=smem, size = 0x4, offset = 0x4, fixed_abs, tag = 'smem constant byte address 0x4 - core index']
  #allocation1 [shape = 'u32[144,128]{1,0:T(1,128)}', space=vmem, size = 0x12000, scoped, tag = 'internal scratch']
  #allocation2 [shape = 'f32[2,18,128]{2,1,0:T(8,128)}', space=vmem, size = 0x6000, scoped, tag = 'scratch operand']
  %s0 = inlined_call_operand.vmem [shape: f32[2,16,128], index: 0, kind: input, shape index: {}]
  %s1 = inlined_call_operand.vmem [shape: f32[1,128], index: 1, kind: input, shape index: {}]
  %s2 = inlined_call_operand.vmem [shape: f32[1,128], index: 2, kind: input, shape index: {}]
  %s3 = inlined_call_operand.vmem [shape: f32[3,128,128], index: 3, kind: input, shape index: {}]
  %s4 = inlined_call_operand.vmem [shape: f32[2,16,128], index: 4, kind: output, shape index: {0}]
  %s5 = inlined_call_operand.vmem [shape: f32[1,2,128], index: 5, kind: output, shape index: {1}]
  %6 = xla_tuple %s4, %s5
  %s7 = sld [smem:[#allocation0]]
  $region34: #{conv_block_forward.4} parent=0
    _
  %s9 = ssub.s32 1, %s7
  %s10 = scalar_select 0, %s9, %s7
  // Predicated region
  $region2: #{conv_block_forward.4} parent=0 // pred_check
    _
  $region3: #{conv_block_forward.4} parent=0 // pred_check_branch
    %12 = sbr.rel (0) target = $region5
  $region4: #{conv_block_forward.4} parent=0 // pred_region
    _
  $region5: #{conv_block_forward.4} parent=0 // pred_fallthru
    _
  // Predicated region
  $region6: #{conv_block_forward.4} parent=0 // pred_check
    _
  $region7: #{conv_block_forward.4} parent=0 // pred_check_branch
    %14 = sbr.rel (0) target = $region9
  $region8: #{conv_block_forward.4} parent=0 // pred_region
    _
  $region9: #{conv_block_forward.4} parent=0 // pred_fallthru
    _
  // Predicated region
  $region10: #{conv_block_forward.4} parent=0 // pred_check
    _
  $region11: #{conv_block_forward.4} parent=0 // pred_check_branch
    %16 = sbr.rel (0) target = $region13
  $region12: #{conv_block_forward.4} parent=0 // pred_region
    _
  $region13: #{conv_block_forward.4} parent=0 // pred_fallthru
    _
  // Predicated region
  $region14: #{conv_block_forward.4} parent=0 // pred_check
    _
  $region15: #{conv_block_forward.4} parent=0 // pred_check_branch
    %18 = sbr.rel (0) target = $region17
  $region16: #{conv_block_forward.4} parent=0 // pred_region
    _
  $region17: #{conv_block_forward.4} parent=0 // pred_fallthru
    _
  %v19 = vld [vmem:[%s0] sm:$0xff]
  %v20 = vld [vmem:[%s0 + $0x8] sm:$0xff]
  %v21 = vld [vmem:[%s0 + $0x10] sm:$0xff]
  %v22 = vld [vmem:[%s0 + $0x18] sm:$0xff]
  %v23 = vld [vmem:[%s1] sm:$0x1]
  %v25 = vlaneseq
  %v26 = vshrl.u32 %v25, 7
  %v27 = vsub.s32 0, %v26
  %v28 = vrot.slane %v23, %v27
  %v30 = vmul.f32 %v19, %v28
  %v31 = vmul.f32 %v20, %v28
  %v32 = vmul.f32 %v21, %v28
  %v33 = vmul.f32 %v22, %v28
  %v34 = vld [vmem:[%s2] sm:$0x1]
  %v36 = vlaneseq
  %v37 = vshrl.u32 %v36, 7
  %v38 = vsub.s32 0, %v37
  %v39 = vrot.slane %v34, %v38
  %v41 = vadd.f32 %v30, %v39
  %v42 = vadd.f32 %v31, %v39
  %v43 = vadd.f32 %v32, %v39
  %v44 = vadd.f32 %v33, %v39
  %v45 = vmax.f32 %v41, 0.0
  %v46 = vmax.f32 %v42, 0.0
  %v47 = vmax.f32 %v43, 0.0
  %v48 = vmax.f32 %v44, 0.0
  %49 = vst [vmem:[#allocation2] sm:$0x1] 0.0
  %50 = vst [vmem:[#allocation2 + $0x18] sm:$0x1] 0.0
  %51 = vst [vmem:[#allocation2 + $0x11] sm:$0x1] 0.0
  %52 = vst [vmem:[#allocation2 + $0x29] sm:$0x1] 0.0
  %53 = vst [vmem:[#allocation2 + $0x1] sm:$0xff] %v45
  %54 = vst [vmem:[#allocation2 + $0x9] sm:$0xff] %v46
  %55 = vst [vmem:[#allocation2 + $0x19] sm:$0xff] %v47
  %56 = vst [vmem:[#allocation2 + $0x21] sm:$0xff] %v48
  %v57 = vld [vmem:[#allocation2] sm:$0xff]
  %v58 = vld [vmem:[#allocation2 + $0x8] sm:$0xff]
  %v59 = vld [vmem:[#allocation2 + $0x18] sm:$0xff]
  %v60 = vld [vmem:[#allocation2 + $0x20] sm:$0xff]
  %v61 = vld [vmem:[%s3] sm:$0xff]
  %v62 = vld [vmem:[%s3 + $0x8] sm:$0xff]
  %v63 = vld [vmem:[%s3 + $0x10] sm:$0xff]
  %v64 = vld [vmem:[%s3 + $0x18] sm:$0xff]
  %v65 = vld [vmem:[%s3 + $0x20] sm:$0xff]
  %v66 = vld [vmem:[%s3 + $0x28] sm:$0xff]
  %v67 = vld [vmem:[%s3 + $0x30] sm:$0xff]
  %v68 = vld [vmem:[%s3 + $0x38] sm:$0xff]
  %v69 = vld [vmem:[%s3 + $0x40] sm:$0xff]
  %v70 = vld [vmem:[%s3 + $0x48] sm:$0xff]
  %v71 = vld [vmem:[%s3 + $0x50] sm:$0xff]
  %v72 = vld [vmem:[%s3 + $0x58] sm:$0xff]
  %v73 = vld [vmem:[%s3 + $0x60] sm:$0xff]
  %v74 = vld [vmem:[%s3 + $0x68] sm:$0xff]
  %v75 = vld [vmem:[%s3 + $0x70] sm:$0xff]
  %v76 = vld [vmem:[%s3 + $0x78] sm:$0xff]
  %v77 = vld [vmem:[#allocation2 + $0x1] sm:$0xff]
  %v78 = vld [vmem:[#allocation2 + $0x9] sm:$0xff]
  %v79 = vld [vmem:[#allocation2 + $0x19] sm:$0xff]
  %v80 = vld [vmem:[#allocation2 + $0x21] sm:$0xff]
  %s81 = scalar_lea.vmem %s3, 128
  %v82 = vld [vmem:[%s81] sm:$0xff]
  %v83 = vld [vmem:[%s81 + $0x8] sm:$0xff]
  %v84 = vld [vmem:[%s81 + $0x10] sm:$0xff]
  %v85 = vld [vmem:[%s81 + $0x18] sm:$0xff]
  %v86 = vld [vmem:[%s81 + $0x20] sm:$0xff]
  %v87 = vld [vmem:[%s81 + $0x28] sm:$0xff]
  %v88 = vld [vmem:[%s81 + $0x30] sm:$0xff]
  %v89 = vld [vmem:[%s81 + $0x38] sm:$0xff]
  %v90 = vld [vmem:[%s81 + $0x40] sm:$0xff]
  %v91 = vld [vmem:[%s81 + $0x48] sm:$0xff]
  %v92 = vld [vmem:[%s81 + $0x50] sm:$0xff]
  %v93 = vld [vmem:[%s81 + $0x58] sm:$0xff]
  %v94 = vld [vmem:[%s81 + $0x60] sm:$0xff]
  %v95 = vld [vmem:[%s81 + $0x68] sm:$0xff]
  %v96 = vld [vmem:[%s81 + $0x70] sm:$0xff]
  %v97 = vld [vmem:[%s81 + $0x78] sm:$0xff]
  %98 = vmatprep.subr.mxu0 0.0
  %99 = vmatpush1.msra.mxu0 %v82
  %100 = vmatprep.subr.mxu0 0.0
  %101 = vmatpush1.msra.mxu0 %v83
  %102 = vmatprep.subr.mxu0 0.0
  %103 = vmatpush1.msra.mxu0 %v84
  %104 = vmatprep.subr.mxu0 0.0
  %105 = vmatpush1.msra.mxu0 %v85
  %106 = vmatprep.subr.mxu0 0.0
  %107 = vmatpush1.msra.mxu0 %v86
  %108 = vmatprep.subr.mxu0 0.0
  %109 = vmatpush1.msra.mxu0 %v87
  %110 = vmatprep.subr.mxu0 0.0
  %111 = vmatpush1.msra.mxu0 %v88
  %112 = vmatprep.subr.mxu0 0.0
  %113 = vmatpush1.msra.mxu0 %v89
  %114 = vmatprep.subr.mxu0 0.0
  %115 = vmatpush1.msra.mxu0 %v90
  %116 = vmatprep.subr.mxu0 0.0
  %117 = vmatpush1.msra.mxu0 %v91
  %118 = vmatprep.subr.mxu0 0.0
  %119 = vmatpush1.msra.mxu0 %v92
  %120 = vmatprep.subr.mxu0 0.0
  %121 = vmatpush1.msra.mxu0 %v93
  %122 = vmatprep.subr.mxu0 0.0
  %123 = vmatpush1.msra.mxu0 %v94
  %124 = vmatprep.subr.mxu0 0.0
  %125 = vmatpush1.msra.mxu0 %v95
  %126 = vmatprep.subr.mxu0 0.0
  %127 = vmatpush1.msra.mxu0 %v96
  %128 = vmatprep.subr.mxu0 0.0
  %129 = vmatpush1.msra.mxu0 %v97
  %130 = vmatprep.subr.mxu0 0.0
  %131 = vmatpush1.msra.mxu0 0.0
  %132 = vmatprep.subr.mxu0 0.0
  %133 = vmatpush1.msra.mxu0 0.0
  %134 = vmatprep.subr.mxu0 0.0
  %135 = vmatpush1.msra.mxu0 0.0
  %136 = vmatprep.subr.mxu0 0.0
  %137 = vmatpush1.msra.mxu0 0.0
  %138 = vmatprep.subr.mxu0 0.0
  %139 = vmatpush1.msra.mxu0 0.0
  %140 = vmatprep.subr.mxu0 0.0
  %141 = vmatpush1.msra.mxu0 0.0
  %142 = vmatprep.subr.mxu0 0.0
  %143 = vmatpush1.msra.mxu0 0.0
  %144 = vmatprep.subr.mxu0 0.0
  %145 = vmatpush1.msra.mxu0 0.0
  %146 = vmatprep.subr.mxu0 0.0
  %147 = vmatpush1.msra.mxu0 0.0
  %148 = vmatprep.subr.mxu0 0.0
  %149 = vmatpush1.msra.mxu0 0.0
  %150 = vmatprep.subr.mxu0 0.0
  %151 = vmatpush1.msra.mxu0 0.0
  %152 = vmatprep.subr.mxu0 0.0
  %153 = vmatpush1.msra.mxu0 0.0
  %154 = vmatprep.subr.mxu0 0.0
  %155 = vmatpush1.msra.mxu0 0.0
  %156 = vmatprep.subr.mxu0 0.0
  %157 = vmatpush1.msra.mxu0 0.0
  %158 = vmatprep.subr.mxu0 0.0
  %159 = vmatpush1.msra.mxu0 0.0
  %160 = vmatprep.subr.mxu0 0.0
  %161 = vmatpush1.msra.mxu0 0.0
  %162 = vmatprep.mubr.f32.mxu0 0.0
  %163 = vmatmul.mubr.f32.gmra.mrb[0].mxu0 %v77
  %v164 = vpop.f32.mrb[0].mxu0
  %v165 = vadd.f32 0.0, %v164
  %v166 = vpop.f32.mrb[0].mxu0
  %167 = vmatprep.mubr.f32.mxu0 0.0
  %168 = vmatmul.mubr.f32.gmra.mrb[0].mxu0 %v78
  %v169 = vpop.f32.mrb[0].mxu0
  %v170 = vadd.f32 0.0, %v169
  %v171 = vpop.f32.mrb[0].mxu0
  %172 = vmatprep.mubr.f32.mxu0 0.0
  %173 = vmatmul.mubr.f32.gmra.mrb[0].mxu0 %v79
  %v174 = vpop.f32.mrb[0].mxu0
  %v175 = vadd.f32 0.0, %v174
  %v176 = vpop.f32.mrb[0].mxu0
  %177 = vmatprep.mubr.f32.mxu0 0.0
  %178 = vmatmul.mubr.f32.gmra.mrb[0].mxu0 %v80
  %v179 = vpop.f32.mrb[0].mxu0
  %v180 = vadd.f32 0.0, %v179
  %v181 = vpop.f32.mrb[0].mxu0
  %182 = vdwg.mxu0
  %183 = vmatprep.subr.mxu0 0.0
  %184 = vmatpush1.msra.mxu0 %v61
  %185 = vmatprep.subr.mxu0 0.0
  %186 = vmatpush1.msra.mxu0 %v62
  %187 = vmatprep.subr.mxu0 0.0
  %188 = vmatpush1.msra.mxu0 %v63
  %189 = vmatprep.subr.mxu0 0.0
  %190 = vmatpush1.msra.mxu0 %v64
  %191 = vmatprep.subr.mxu0 0.0
  %192 = vmatpush1.msra.mxu0 %v65
  %193 = vmatprep.subr.mxu0 0.0
  %194 = vmatpush1.msra.mxu0 %v66
  %195 = vmatprep.subr.mxu0 0.0
  %196 = vmatpush1.msra.mxu0 %v67
  %197 = vmatprep.subr.mxu0 0.0
  %198 = vmatpush1.msra.mxu0 %v68
  %199 = vmatprep.subr.mxu0 0.0
  %200 = vmatpush1.msra.mxu0 %v69
  %201 = vmatprep.subr.mxu0 0.0
  %202 = vmatpush1.msra.mxu0 %v70
  %203 = vmatprep.subr.mxu0 0.0
  %204 = vmatpush1.msra.mxu0 %v71
  %205 = vmatprep.subr.mxu0 0.0
  %206 = vmatpush1.msra.mxu0 %v72
  %207 = vmatprep.subr.mxu0 0.0
  %208 = vmatpush1.msra.mxu0 %v73
  %209 = vmatprep.subr.mxu0 0.0
  %210 = vmatpush1.msra.mxu0 %v74
  %211 = vmatprep.subr.mxu0 0.0
  %212 = vmatpush1.msra.mxu0 %v75
  %213 = vmatprep.subr.mxu0 0.0
  %214 = vmatpush1.msra.mxu0 %v76
  %215 = vmatprep.subr.mxu0 0.0
  %216 = vmatpush1.msra.mxu0 0.0
  %217 = vmatprep.subr.mxu0 0.0
  %218 = vmatpush1.msra.mxu0 0.0
  %219 = vmatprep.subr.mxu0 0.0
  %220 = vmatpush1.msra.mxu0 0.0
  %221 = vmatprep.subr.mxu0 0.0
  %222 = vmatpush1.msra.mxu0 0.0
  %223 = vmatprep.subr.mxu0 0.0
  %224 = vmatpush1.msra.mxu0 0.0
  %225 = vmatprep.subr.mxu0 0.0
  %226 = vmatpush1.msra.mxu0 0.0
  %227 = vmatprep.subr.mxu0 0.0
  %228 = vmatpush1.msra.mxu0 0.0
  %229 = vmatprep.subr.mxu0 0.0
  %230 = vmatpush1.msra.mxu0 0.0
  %231 = vmatprep.subr.mxu0 0.0
  %232 = vmatpush1.msra.mxu0 0.0
  %233 = vmatprep.subr.mxu0 0.0
  %234 = vmatpush1.msra.mxu0 0.0
  %235 = vmatprep.subr.mxu0 0.0
  %236 = vmatpush1.msra.mxu0 0.0
  %237 = vmatprep.subr.mxu0 0.0
  %238 = vmatpush1.msra.mxu0 0.0
  %239 = vmatprep.subr.mxu0 0.0
  %240 = vmatpush1.msra.mxu0 0.0
  %241 = vmatprep.subr.mxu0 0.0
  %242 = vmatpush1.msra.mxu0 0.0
  %243 = vmatprep.subr.mxu0 0.0
  %244 = vmatpush1.msra.mxu0 0.0
  %245 = vmatprep.subr.mxu0 0.0
  %246 = vmatpush1.msra.mxu0 0.0
  %247 = vmatprep.mubr.f32.mxu0 0.0
  %248 = vmatmul.mubr.f32.gmra.mrb[0].mxu0 %v57
  %v249 = vpop.f32.mrb[0].mxu0
  %v250 = vadd.f32 %v165, %v249
  %v251 = vpop.f32.mrb[0].mxu0
  %252 = vmatprep.mubr.f32.mxu0 0.0
  %253 = vmatmul.mubr.f32.gmra.mrb[0].mxu0 %v58
  %v254 = vpop.f32.mrb[0].mxu0
  %v255 = vadd.f32 %v170, %v254
  %v256 = vpop.f32.mrb[0].mxu0
  %257 = vmatprep.mubr.f32.mxu0 0.0
  %258 = vmatmul.mubr.f32.gmra.mrb[0].mxu0 %v59
  %v259 = vpop.f32.mrb[0].mxu0
  %v260 = vadd.f32 %v175, %v259
  %v261 = vpop.f32.mrb[0].mxu0
  %262 = vmatprep.mubr.f32.mxu0 0.0
  %263 = vmatmul.mubr.f32.gmra.mrb[0].mxu0 %v60
  %v264 = vpop.f32.mrb[0].mxu0
  %v265 = vadd.f32 %v180, %v264
  %v266 = vpop.f32.mrb[0].mxu0
  %267 = vdwg.mxu0
  %v268 = vld [vmem:[#allocation2 + $0x2] sm:$0xff]
  %v269 = vld [vmem:[#allocation2 + $0xa] sm:$0xff]
  %v270 = vld [vmem:[#allocation2 + $0x1a] sm:$0xff]
  %v271 = vld [vmem:[#allocation2 + $0x22] sm:$0xff]
  %s272 = scalar_lea.vmem %s3, 256
  %v273 = vld [vmem:[%s272] sm:$0xff]
  %v274 = vld [vmem:[%s272 + $0x8] sm:$0xff]
  %v275 = vld [vmem:[%s272 + $0x10] sm:$0xff]
  %v276 = vld [vmem:[%s272 + $0x18] sm:$0xff]
  %v277 = vld [vmem:[%s272 + $0x20] sm:$0xff]
  %v278 = vld [vmem:[%s272 + $0x28] sm:$0xff]
  %v279 = vld [vmem:[%s272 + $0x30] sm:$0xff]
  %v280 = vld [vmem:[%s272 + $0x38] sm:$0xff]
  %v281 = vld [vmem:[%s272 + $0x40] sm:$0xff]
  %v282 = vld [vmem:[%s272 + $0x48] sm:$0xff]
  %v283 = vld [vmem:[%s272 + $0x50] sm:$0xff]
  %v284 = vld [vmem:[%s272 + $0x58] sm:$0xff]
  %v285 = vld [vmem:[%s272 + $0x60] sm:$0xff]
  %v286 = vld [vmem:[%s272 + $0x68] sm:$0xff]
  %v287 = vld [vmem:[%s272 + $0x70] sm:$0xff]
  %v288 = vld [vmem:[%s272 + $0x78] sm:$0xff]
  %289 = vmatprep.subr.mxu0 0.0
  %290 = vmatpush1.msra.mxu0 %v273
  %291 = vmatprep.subr.mxu0 0.0
  %292 = vmatpush1.msra.mxu0 %v274
  %293 = vmatprep.subr.mxu0 0.0
  %294 = vmatpush1.msra.mxu0 %v275
  %295 = vmatprep.subr.mxu0 0.0
  %296 = vmatpush1.msra.mxu0 %v276
  %297 = vmatprep.subr.mxu0 0.0
  %298 = vmatpush1.msra.mxu0 %v277
  %299 = vmatprep.subr.mxu0 0.0
  %300 = vmatpush1.msra.mxu0 %v278
  %301 = vmatprep.subr.mxu0 0.0
  %302 = vmatpush1.msra.mxu0 %v279
  %303 = vmatprep.subr.mxu0 0.0
  %304 = vmatpush1.msra.mxu0 %v280
  %305 = vmatprep.subr.mxu0 0.0
  %306 = vmatpush1.msra.mxu0 %v281
  %307 = vmatprep.subr.mxu0 0.0
  %308 = vmatpush1.msra.mxu0 %v282
  %309 = vmatprep.subr.mxu0 0.0
  %310 = vmatpush1.msra.mxu0 %v283
  %311 = vmatprep.subr.mxu0 0.0
  %312 = vmatpush1.msra.mxu0 %v284
  %313 = vmatprep.subr.mxu0 0.0
  %314 = vmatpush1.msra.mxu0 %v285
  %315 = vmatprep.subr.mxu0 0.0
  %316 = vmatpush1.msra.mxu0 %v286
  %317 = vmatprep.subr.mxu0 0.0
  %318 = vmatpush1.msra.mxu0 %v287
  %319 = vmatprep.subr.mxu0 0.0
  %320 = vmatpush1.msra.mxu0 %v288
  %321 = vmatprep.subr.mxu0 0.0
  %322 = vmatpush1.msra.mxu0 0.0
  %323 = vmatprep.subr.mxu0 0.0
  %324 = vmatpush1.msra.mxu0 0.0
  %325 = vmatprep.subr.mxu0 0.0
  %326 = vmatpush1.msra.mxu0 0.0
  %327 = vmatprep.subr.mxu0 0.0
  %328 = vmatpush1.msra.mxu0 0.0
  %329 = vmatprep.subr.mxu0 0.0
  %330 = vmatpush1.msra.mxu0 0.0
  %331 = vmatprep.subr.mxu0 0.0
  %332 = vmatpush1.msra.mxu0 0.0
  %333 = vmatprep.subr.mxu0 0.0
  %334 = vmatpush1.msra.mxu0 0.0
  %335 = vmatprep.subr.mxu0 0.0
  %336 = vmatpush1.msra.mxu0 0.0
  %337 = vmatprep.subr.mxu0 0.0
  %338 = vmatpush1.msra.mxu0 0.0
  %339 = vmatprep.subr.mxu0 0.0
  %340 = vmatpush1.msra.mxu0 0.0
  %341 = vmatprep.subr.mxu0 0.0
  %342 = vmatpush1.msra.mxu0 0.0
  %343 = vmatprep.subr.mxu0 0.0
  %344 = vmatpush1.msra.mxu0 0.0
  %345 = vmatprep.subr.mxu0 0.0
  %346 = vmatpush1.msra.mxu0 0.0
  %347 = vmatprep.subr.mxu0 0.0
  %348 = vmatpush1.msra.mxu0 0.0
  %349 = vmatprep.subr.mxu0 0.0
  %350 = vmatpush1.msra.mxu0 0.0
  %351 = vmatprep.subr.mxu0 0.0
  %352 = vmatpush1.msra.mxu0 0.0
  %353 = vmatprep.mubr.f32.mxu0 0.0
  %354 = vmatmul.mubr.f32.gmra.mrb[0].mxu0 %v268
  %v355 = vpop.f32.mrb[0].mxu0
  %v356 = vadd.f32 0.0, %v355
  %v357 = vpop.f32.mrb[0].mxu0
  %358 = vmatprep.mubr.f32.mxu0 0.0
  %359 = vmatmul.mubr.f32.gmra.mrb[0].mxu0 %v269
  %v360 = vpop.f32.mrb[0].mxu0
  %v361 = vadd.f32 0.0, %v360
  %v362 = vpop.f32.mrb[0].mxu0
  %363 = vmatprep.mubr.f32.mxu0 0.0
  %364 = vmatmul.mubr.f32.gmra.mrb[0].mxu0 %v270
  %v365 = vpop.f32.mrb[0].mxu0
  %v366 = vadd.f32 0.0, %v365
  %v367 = vpop.f32.mrb[0].mxu0
  %368 = vmatprep.mubr.f32.mxu0 0.0
  %369 = vmatmul.mubr.f32.gmra.mrb[0].mxu0 %v271
  %v370 = vpop.f32.mrb[0].mxu0
  %v371 = vadd.f32 0.0, %v370
  %v372 = vpop.f32.mrb[0].mxu0
  %373 = vdwg.mxu0
  %v374 = vadd.f32 %v250, %v356
  %v375 = vadd.f32 %v255, %v361
  %v376 = vadd.f32 %v260, %v366
  %v377 = vadd.f32 %v265, %v371
  %378 = vst [vmem:[%s4] sm:$0xff] %v374
  %379 = vst [vmem:[%s4 + $0x8] sm:$0xff] %v375
  %380 = vst [vmem:[%s4 + $0x10] sm:$0xff] %v376
  %381 = vst [vmem:[%s4 + $0x18] sm:$0xff] %v377
  %v382 = vadd.f32 %v374, %v375
  %v383 = vadd.f32 %v382, %v376
  %v384 = vadd.f32 %v383, %v377
  %v385 = vrot.slane %v384, 4
  %v386 = vadd.f32 %v384, %v385
  %v387 = vrot.slane %v386, 2
  %v388 = vadd.f32 %v386, %v387
  %v389 = vrot.slane %v388, 1
  %v390 = vadd.f32 %v388, %v389
  %v391 = vmul.f32 %v374, %v374
  %v392 = vmul.f32 %v375, %v375
  %v393 = vmul.f32 %v376, %v376
  %v394 = vmul.f32 %v377, %v377
  %v395 = vadd.f32 %v391, %v392
  %v396 = vadd.f32 %v395, %v393
  %v397 = vadd.f32 %v396, %v394
  %v398 = vrot.slane %v397, 4
  %v399 = vadd.f32 %v397, %v398
  %v400 = vrot.slane %v399, 2
  %v401 = vadd.f32 %v399, %v400
  %v402 = vrot.slane %v401, 1
  %v403 = vadd.f32 %v401, %v402
  %vm404 = vcmask 1040384
  %v405 = vsel %vm404, %v390, %v403
  %406 = vst [vmem:[%s5] sm:$0x3] %v405
  // Predicated region
  $region18: #{conv_block_forward.4} parent=0 // pred_check
    _
  $region19: #{conv_block_forward.4} parent=0 // pred_check_branch
    %408 = sbr.rel (0) target = $region21
  $region20: #{conv_block_forward.4} parent=0 // pred_region
    _
  $region21: #{conv_block_forward.4} parent=0 // pred_fallthru
    _
  // Predicated region
  $region22: #{conv_block_forward.4} parent=0 // pred_check
    _
  $region23: #{conv_block_forward.4} parent=0 // pred_check_branch
    %410 = sbr.rel (0) target = $region25
  $region24: #{conv_block_forward.4} parent=0 // pred_region
    _
  $region25: #{conv_block_forward.4} parent=0 // pred_fallthru
    _
  // Predicated region
  $region26: #{conv_block_forward.4} parent=0 // pred_check
    _
  $region27: #{conv_block_forward.4} parent=0 // pred_check_branch
    %412 = sbr.rel (0) target = $region29
  $region28: #{conv_block_forward.4} parent=0 // pred_region
    _
  $region29: #{conv_block_forward.4} parent=0 // pred_fallthru
    _
  // Predicated region
  $region30: #{conv_block_forward.4} parent=0 // pred_check
    _
  $region31: #{conv_block_forward.4} parent=0 // pred_check_branch
    %414 = sbr.rel (0) target = $region33
  $region32: #{conv_block_forward.4} parent=0 // pred_region
    _
  $region33: #{conv_block_forward.4} parent=0 // pred_fallthru
    _

// kernel: conv_block_forward.5
$region0: #{conv_block_forward.5}
  #allocation0 [shape = 'u32[]', space=smem, size = 0x4, offset = 0x4, fixed_abs, tag = 'smem constant byte address 0x4 - core index']
  #allocation1 [shape = 'u32[144,128]{1,0:T(1,128)}', space=vmem, size = 0x12000, scoped, tag = 'internal scratch']
  %s0 = inlined_call_operand.vmem [shape: f32[2,16,128], index: 0, kind: input, shape index: {}]
  %s1 = inlined_call_operand.vmem [shape: f32[1,128], index: 1, kind: input, shape index: {}]
  %s2 = inlined_call_operand.vmem [shape: f32[1,128], index: 2, kind: input, shape index: {}]
  %s3 = inlined_call_operand.vmem [shape: f32[2,16,128], index: 3, kind: output, shape index: {}]
  %s4 = sld [smem:[#allocation0]]
  $region22: #{conv_block_forward.5} parent=0
    _
  %s6 = ssub.s32 1, %s4
  %s7 = scalar_select 0, %s6, %s4
  // Predicated region
  $region2: #{conv_block_forward.5} parent=0 // pred_check
    _
  $region3: #{conv_block_forward.5} parent=0 // pred_check_branch
    %9 = sbr.rel (0) target = $region5
  $region4: #{conv_block_forward.5} parent=0 // pred_region
    _
  $region5: #{conv_block_forward.5} parent=0 // pred_fallthru
    _
  // Predicated region
  $region6: #{conv_block_forward.5} parent=0 // pred_check
    _
  $region7: #{conv_block_forward.5} parent=0 // pred_check_branch
    %11 = sbr.rel (0) target = $region9
  $region8: #{conv_block_forward.5} parent=0 // pred_region
    _
  $region9: #{conv_block_forward.5} parent=0 // pred_fallthru
    _
  // Predicated region
  $region10: #{conv_block_forward.5} parent=0 // pred_check
    _
  $region11: #{conv_block_forward.5} parent=0 // pred_check_branch
    %13 = sbr.rel (0) target = $region13
  $region12: #{conv_block_forward.5} parent=0 // pred_region
    _
  $region13: #{conv_block_forward.5} parent=0 // pred_fallthru
    _
  %v14 = vld [vmem:[%s0] sm:$0xff]
  %v15 = vld [vmem:[%s0 + $0x8] sm:$0xff]
  %v16 = vld [vmem:[%s0 + $0x10] sm:$0xff]
  %v17 = vld [vmem:[%s0 + $0x18] sm:$0xff]
  %v18 = vld [vmem:[%s1] sm:$0x1]
  %v20 = vlaneseq
  %v21 = vshrl.u32 %v20, 7
  %v22 = vsub.s32 0, %v21
  %v23 = vrot.slane %v18, %v22
  %v25 = vmul.f32 %v14, %v23
  %v26 = vmul.f32 %v15, %v23
  %v27 = vmul.f32 %v16, %v23
  %v28 = vmul.f32 %v17, %v23
  %v29 = vld [vmem:[%s2] sm:$0x1]
  %v31 = vlaneseq
  %v32 = vshrl.u32 %v31, 7
  %v33 = vsub.s32 0, %v32
  %v34 = vrot.slane %v29, %v33
  %v36 = vadd.f32 %v25, %v34
  %v37 = vadd.f32 %v26, %v34
  %v38 = vadd.f32 %v27, %v34
  %v39 = vadd.f32 %v28, %v34
  %v40 = vmax.f32 %v36, 0.0
  %v41 = vmax.f32 %v37, 0.0
  %v42 = vmax.f32 %v38, 0.0
  %v43 = vmax.f32 %v39, 0.0
  %44 = vst [vmem:[%s3] sm:$0xff] %v40
  %45 = vst [vmem:[%s3 + $0x8] sm:$0xff] %v41
  %46 = vst [vmem:[%s3 + $0x10] sm:$0xff] %v42
  %47 = vst [vmem:[%s3 + $0x18] sm:$0xff] %v43
  // Predicated region
  $region14: #{conv_block_forward.5} parent=0 // pred_check
    _
  $region15: #{conv_block_forward.5} parent=0 // pred_check_branch
    %49 = sbr.rel (0) target = $region17
  $region16: #{conv_block_forward.5} parent=0 // pred_region
    _
  $region17: #{conv_block_forward.5} parent=0 // pred_fallthru
    _
  // Predicated region
  $region18: #{conv_block_forward.5} parent=0 // pred_check
    _
  $region19: #{conv_block_forward.5} parent=0 // pred_check_branch
    %51 = sbr.rel (0) target = $region21
  $region20: #{conv_block_forward.5} parent=0 // pred_region
    _
  $region21: #{conv_block_forward.5} parent=0 // pred_fallthru
    _

</llo_original>
